<compile_context>
chip_gen: v6e
topology: v6e:2x2x1
jax: 0.10.0
libtpu: 0.0.40
codegen_flags: <defaults>
</compile_context>

<pallas_src>
import math
import functools

import jax
import jax.numpy as jnp
from jax import lax
from jax.experimental import pallas as pl
from jax.experimental.pallas import tpu as pltpu

LN_EPS = 1e-5
# NOTE: the reference `new_gelu` applies tanh to the *constant* sqrt(2/pi),
# not to the polynomial — reproduced exactly.
GELU_TANH_CONST = math.tanh(math.sqrt(2.0 / math.pi))
MASK_VALUE = -1e30  # finite mask value (safe even if a row were fully masked)

PARAM_ORDER = [
    "wq", "bq", "wkv", "bkv", "wo", "bo",
    "ln1_g", "ln1_b", "ln2_g", "ln2_b",
    "wfc", "bfc", "wp2", "bp2",
]


def _layernorm(z, gamma, beta):
    mu = jnp.mean(z, axis=-1, keepdims=True)
    var = jnp.mean((z - mu) ** 2, axis=-1, keepdims=True)
    return (z - mu) * lax.rsqrt(var + LN_EPS) * gamma + beta


def transformer_block_kernel(
    x_ref,
    wq_ref, bq_ref, wkv_ref, bkv_ref, wo_ref, bo_ref,
    ln1_g_ref, ln1_b_ref, ln2_g_ref, ln2_b_ref,
    wfc_ref, bfc_ref, wp2_ref, bp2_ref,
    o_ref,
    *, num_heads: int, q_tile: int,
):
    f32 = jnp.float32
    bf16 = jnp.bfloat16
    T, C = x_ref.shape[1], x_ref.shape[2]
    H = num_heads
    hs = C // H

    qi = pl.program_id(1)
    q_start = pl.multiple_of(qi * q_tile, q_tile)

    x_full = x_ref[0]                                  # (T, C)  f32
    x_tile = x_ref[0, pl.ds(q_start, q_tile), :]       # (Q, C)  f32

    # ---- ln1 (f32 statistics) ----
    ln1_g = ln1_g_ref[...]
    ln1_b = ln1_b_ref[...]
    h_full = _layernorm(x_full, ln1_g, ln1_b)          # K/V need the full sequence
    h_tile = _layernorm(x_tile, ln1_g, ln1_b)          # Q only needs the tile rows

    # ---- fused K/V projection: one batched matmul over (k-heads ++ v-heads) ----
    hb_kv = jnp.broadcast_to(h_full.astype(bf16)[None], (2 * H, T, C))
    kv = lax.dot_general(
        hb_kv, wkv_ref[...],
        (((2,), (1,)), ((0,), (0,))),
        preferred_element_type=f32,
    ) + bkv_ref[...]                                   # (2H, T, hs)
    k_h = kv[:H].astype(bf16)                          # leading-axis split, no lane slicing
    v_h = kv[H:].astype(bf16)

    # ---- Q projection on the query tile, batched over heads ----
    hb_q = jnp.broadcast_to(h_tile.astype(bf16)[None], (H, q_tile, C))
    q_h = (lax.dot_general(
        hb_q, wq_ref[...],
        (((2,), (1,)), ((0,), (0,))),
        preferred_element_type=f32,
    ) + bq_ref[...]).astype(bf16)                      # (H, Q, hs)

    # ---- causal attention (scores in f32) ----
    scale = C ** (-0.5)      # reference scales by sqrt(embed dim), not head dim
    s = lax.dot_general(
        q_h, k_h,
        (((2,), (2,)), ((0,), (0,))),
        preferred_element_type=f32,
    ) * scale                                          # (H, Q, T)

    q_pos = q_start + lax.broadcasted_iota(jnp.int32, (q_tile, T), 0)
    k_pos = lax.broadcasted_iota(jnp.int32, (q_tile, T), 1)
    causal = k_pos <= q_pos
    s = jnp.where(causal[None], s, MASK_VALUE)

    s = s - jnp.max(s, axis=-1, keepdims=True)
    p = jnp.exp(s)
    denom = jnp.sum(p, axis=-1, keepdims=True)
    p = p * pl.reciprocal(denom, approx=True)
    # attention-dropout: identity (eval mode)

    ctx = lax.dot_general(
        p.astype(bf16), v_h,
        (((2,), (1,)), ((0,), (0,))),
        preferred_element_type=f32,
    )                                                  # (H, Q, hs)

    # ---- output projection: per-head batched matmul + head-sum (== concat @ Wo) ----
    proj = lax.dot_general(
        ctx.astype(bf16), wo_ref[...],
        (((2,), (1,)), ((0,), (0,))),
        preferred_element_type=f32,
    )                                                  # (H, Q, C)
    attn = jnp.sum(proj, axis=0) + bo_ref[...]
    # proj-dropout: identity (eval mode)

    x1 = x_tile + attn                                 # residual 1

    # ---- ln2 applied BEFORE the FFN residual split (as in the reference) ----
    x2 = _layernorm(x1, ln2_g_ref[...], ln2_b_ref[...])

    # ---- feed-forward with the module's exact new_gelu ----
    ff = jnp.dot(x2.astype(bf16), wfc_ref[...],
                 preferred_element_type=f32) + bfc_ref[...]
    ff_sq = ff * ff
    ff = 0.5 * ff * (1.0 + GELU_TANH_CONST * ff * (1.0 + 0.044715 * ff_sq))
    ff = jnp.dot(ff.astype(bf16), wp2_ref[...],
                 preferred_element_type=f32) + bp2_ref[...]
    # ffwd-dropout: identity (eval mode)

    o_ref[0] = x2 + ff


def _pick_q_tile(T):
    # Fill MXU rows: 256 for v6e/v7x-sized tiles, 128 for v5e; fall back to the
    # full sequence for tiny / non-divisible T.
    for cand in (256, 128):
        if T % cand == 0:
            return cand
    return T


def transformer_block_pallas(x, params, num_heads, compute_dtype=jnp.bfloat16):
    B, T, C = x.shape
    assert C % num_heads == 0
    H = num_heads
    hs = C // H
    q_tile = _pick_q_tile(T)
    nq = T // q_tile

    # ---- re-lay out weights: heads on a leading axis, matmul weights in bf16 ----
    def heads_w(w):   # (C, C) -> (H, C, hs)
        return jnp.transpose(w.reshape(C, H, hs), (1, 0, 2)).astype(compute_dtype)

    def heads_b(b):   # (1, C) -> (H, 1, hs)
        return b.reshape(H, 1, hs).astype(jnp.float32)

    prepared = dict(
        wq=heads_w(params["wq"]),
        bq=heads_b(params["bq"]),
        wkv=jnp.concatenate([heads_w(params["wk"]), heads_w(params["wv"])], axis=0),
        bkv=jnp.concatenate([heads_b(params["bk"]), heads_b(params["bv"])], axis=0),
        wo=params["wo"].reshape(H, hs, C).astype(compute_dtype),
        bo=params["bo"].astype(jnp.float32),
        ln1_g=params["ln1_g"].astype(jnp.float32),
        ln1_b=params["ln1_b"].astype(jnp.float32),
        ln2_g=params["ln2_g"].astype(jnp.float32),
        ln2_b=params["ln2_b"].astype(jnp.float32),
        wfc=params["wfc"].astype(compute_dtype),
        bfc=params["bfc"].astype(jnp.float32),
        wp2=params["wp2"].astype(compute_dtype),
        bp2=params["bp2"].astype(jnp.float32),
    )
    w_list = [prepared[k] for k in PARAM_ORDER]

    def whole_spec(a):
        nd = a.ndim
        return pl.BlockSpec(a.shape, lambda b, q, nd=nd: (0,) * nd)

    in_specs = [pl.BlockSpec((1, T, C), lambda b, q: (b, 0, 0))] + \
               [whole_spec(a) for a in w_list]
    out_specs = pl.BlockSpec((1, q_tile, C), lambda b, q: (b, q, 0))

    # Advisory cost estimate for XLA scheduling around the custom call.
    flops = 2 * B * nq * (
        T * C * 2 * C          # fused K/V projection (full seq per q-tile)
        + q_tile * C * C       # Q projection
        + 2 * q_tile * T * C   # scores + p@v (summed over heads)
        + q_tile * C * C       # output projection
        + 8 * q_tile * C * C   # feed-forward
    )
    transcendentals = B * nq * H * q_tile * T
    bytes_accessed = 2 * 4 * B * T * C + sum(
        int(w.size) * w.dtype.itemsize for w in w_list)

    kernel = functools.partial(
        transformer_block_kernel, num_heads=num_heads, q_tile=q_tile)

    return pl.pallas_call(
        kernel,
        out_shape=jax.ShapeDtypeStruct((B, T, C), jnp.float32),
        grid_spec=pltpu.PrefetchScalarGridSpec(
            num_scalar_prefetch=0,
            grid=(B, nq),
            in_specs=in_specs,
            out_specs=out_specs,
        ),
        compiler_params=pltpu.CompilerParams(
            dimension_semantics=("parallel", "parallel"),
            vmem_limit_bytes=64 * 1024 * 1024,
        ),
        cost_estimate=pl.CostEstimate(
            flops=int(flops),
            transcendentals=int(transcendentals),
            bytes_accessed=int(bytes_accessed),
        ),
    )(x.astype(jnp.float32), *w_list)


def init_params(key, n_embed):
    """Deterministic synthetic init mirroring the nn.Linear / nn.LayerNorm shapes."""
    ks = jax.random.split(key, 16)

    def lin(kw, kb, fan_in, fan_out):
        bound = 1.0 / math.sqrt(fan_in)
        w = jax.random.uniform(kw, (fan_in, fan_out), jnp.float32, -bound, bound)
        b = jax.random.uniform(kb, (1, fan_out), jnp.float32, -bound, bound)
        return w, b

    p = {}
    # per-head key/query/value Linears, stacked along the output dim (concat order)
    p["wq"], p["bq"] = lin(ks[0], ks[1], n_embed, n_embed)
    p["wk"], p["bk"] = lin(ks[2], ks[3], n_embed, n_embed)
    p["wv"], p["bv"] = lin(ks[4], ks[5], n_embed, n_embed)
    p["wo"], p["bo"] = lin(ks[6], ks[7], n_embed, n_embed)          # MHA proj
    p["wfc"], p["bfc"] = lin(ks[8], ks[9], n_embed, 4 * n_embed)    # FeedForward.fc
    p["wp2"], p["bp2"] = lin(ks[10], ks[11], 4 * n_embed, n_embed)  # FeedForward.proj
    # LayerNorms: non-trivial affine params (still deterministic)
    p["ln1_g"] = 1.0 + 0.1 * jax.random.normal(ks[12], (1, n_embed), jnp.float32)
    p["ln1_b"] = 0.1 * jax.random.normal(ks[13], (1, n_embed), jnp.float32)
    p["ln2_g"] = 1.0 + 0.1 * jax.random.normal(ks[14], (1, n_embed), jnp.float32)
    p["ln2_b"] = 0.1 * jax.random.normal(ks[15], (1, n_embed), jnp.float32)
    return p


def reference_forward(x, p, num_heads):
    """Pure-JAX f32 reference of the PyTorch forward (eval mode)."""
    B, T, C = x.shape
    hs = C // num_heads

    def ln(z, g, b):
        mu = z.mean(-1, keepdims=True)
        var = ((z - mu) ** 2).mean(-1, keepdims=True)
        return (z - mu) / jnp.sqrt(var + LN_EPS) * g + b

    h = ln(x, p["ln1_g"], p["ln1_b"])
    q = h @ p["wq"] + p["bq"]
    k = h @ p["wk"] + p["bk"]
    v = h @ p["wv"] + p["bv"]

    def split(z):
        return z.reshape(B, T, num_heads, hs).transpose(0, 2, 1, 3)

    qh, kh, vh = split(q), split(k), split(v)
    scores = jnp.einsum("bhtd,bhsd->bhts", qh, kh) * C ** (-0.5)
    mask = jnp.tril(jnp.ones((T, T), dtype=bool))
    scores = jnp.where(mask, scores, -jnp.inf)
    attn = jax.nn.softmax(scores, axis=-1)
    out = jnp.einsum("bhts,bhsd->bhtd", attn, vh).transpose(0, 2, 1, 3).reshape(B, T, C)
    out = out @ p["wo"] + p["bo"]
    x = x + out
    x = ln(x, p["ln2_g"], p["ln2_b"])
    ff = x @ p["wfc"] + p["bfc"]
    ff = 0.5 * ff * (1.0 + GELU_TANH_CONST * (ff + 0.044715 * ff ** 3))
    ff = ff @ p["wp2"] + p["bp2"]
    return x + ff


if __name__ == "__main__":
    # Small shapes: batch=2, seq(block_size)=8, n_embed=32, num_heads=4 (head_size=8)
    B, T, n_embed, num_heads = 2, 8, 32, 4

    key = jax.random.PRNGKey(0)
    kx, kp = jax.random.split(key)
    x = jax.random.normal(kx, (B, T, n_embed), jnp.float32)
    params = init_params(kp, n_embed)

    out = transformer_block_pallas(x, params, num_heads)
    out = jax.block_until_ready(out)

    ref = reference_forward(x, params, num_heads)
    assert out.shape == (B, T, n_embed)
    # bf16 matmuls with f32 accumulation (plus approx reciprocal) vs a pure-f32
    # reference → tolerance set accordingly.
    assert jnp.allclose(out, ref, atol=3e-2, rtol=3e-2), \
        "Pallas output mismatch vs JAX reference"

    print("KERNEL_OK")
</pallas_src>

<mosaic_0001>
module attributes {stable_mosaic.version = 11 : i64} {
  func.func @transformer_block_kernel(%arg0: i32, %arg1: i32, %arg2: memref<1x8x32xf32, #tpu.memory_space<vmem>>, %arg3: memref<4x32x8xbf16, #tpu.memory_space<vmem>>, %arg4: memref<4x1x8xf32, #tpu.memory_space<vmem>>, %arg5: memref<8x32x8xbf16, #tpu.memory_space<vmem>>, %arg6: memref<8x1x8xf32, #tpu.memory_space<vmem>>, %arg7: memref<4x8x32xbf16, #tpu.memory_space<vmem>>, %arg8: memref<1x32xf32, #tpu.memory_space<vmem>>, %arg9: memref<1x32xf32, #tpu.memory_space<vmem>>, %arg10: memref<1x32xf32, #tpu.memory_space<vmem>>, %arg11: memref<1x32xf32, #tpu.memory_space<vmem>>, %arg12: memref<1x32xf32, #tpu.memory_space<vmem>>, %arg13: memref<32x128xbf16, #tpu.memory_space<vmem>>, %arg14: memref<1x128xf32, #tpu.memory_space<vmem>>, %arg15: memref<128x32xbf16, #tpu.memory_space<vmem>>, %arg16: memref<1x32xf32, #tpu.memory_space<vmem>>, %arg17: memref<1x8x32xf32, #tpu.memory_space<vmem>>) attributes {dimension_semantics = [#tpu.dimension_semantics<parallel>, #tpu.dimension_semantics<parallel>], iteration_bounds = array<i64: 2, 1>, scalar_prefetch = 0 : i64, scratch_operands = 0 : i64, tpu.core_type = #tpu.core_type<tc>, window_params = [{transform_indices = @transform_0, window_bounds = array<i64: 1, 8, 32>}, {pipeline_mode = #tpu.pipeline_mode<synchronous>, transform_indices = @transform_1, window_bounds = array<i64: 4, 32, 8>}, {pipeline_mode = #tpu.pipeline_mode<synchronous>, transform_indices = @transform_2, window_bounds = array<i64: 4, 1, 8>}, {pipeline_mode = #tpu.pipeline_mode<synchronous>, transform_indices = @transform_3, window_bounds = array<i64: 8, 32, 8>}, {pipeline_mode = #tpu.pipeline_mode<synchronous>, transform_indices = @transform_4, window_bounds = array<i64: 8, 1, 8>}, {pipeline_mode = #tpu.pipeline_mode<synchronous>, transform_indices = @transform_5, window_bounds = array<i64: 4, 8, 32>}, {pipeline_mode = #tpu.pipeline_mode<synchronous>, transform_indices = @transform_6, window_bounds = array<i64: 1, 32>}, {pipeline_mode = #tpu.pipeline_mode<synchronous>, transform_indices = @transform_7, window_bounds = array<i64: 1, 32>}, {pipeline_mode = #tpu.pipeline_mode<synchronous>, transform_indices = @transform_8, window_bounds = array<i64: 1, 32>}, {pipeline_mode = #tpu.pipeline_mode<synchronous>, transform_indices = @transform_9, window_bounds = array<i64: 1, 32>}, {pipeline_mode = #tpu.pipeline_mode<synchronous>, transform_indices = @transform_10, window_bounds = array<i64: 1, 32>}, {pipeline_mode = #tpu.pipeline_mode<synchronous>, transform_indices = @transform_11, window_bounds = array<i64: 32, 128>}, {pipeline_mode = #tpu.pipeline_mode<synchronous>, transform_indices = @transform_12, window_bounds = array<i64: 1, 128>}, {pipeline_mode = #tpu.pipeline_mode<synchronous>, transform_indices = @transform_13, window_bounds = array<i64: 128, 32>}, {pipeline_mode = #tpu.pipeline_mode<synchronous>, transform_indices = @transform_14, window_bounds = array<i64: 1, 32>}, {transform_indices = @transform_15, window_bounds = array<i64: 1, 8, 32>}]} {
    %c8_i32 = arith.constant 8 : i32
    %0 = arith.muli %arg1, %c8_i32 : i32
    %1 = tpu.assume_multiple %0, 8 : i32
    %c0 = arith.constant 0 : index
    %c0_0 = arith.constant 0 : index
    %c0_1 = arith.constant 0 : index
    %2 = vector.load %arg2[%c0, %c0_0, %c0_1] : memref<1x8x32xf32, #tpu.memory_space<vmem>>, vector<1x8x32xf32>
    %3 = vector.shape_cast %2 : vector<1x8x32xf32> to vector<8x32xf32>
    %c0_2 = arith.constant 0 : index
    %4 = arith.index_cast %1 : i32 to index
    %c0_3 = arith.constant 0 : index
    %5 = vector.load %arg2[%c0_2, %4, %c0_3] : memref<1x8x32xf32, #tpu.memory_space<vmem>>, vector<1x8x32xf32>
    %6 = vector.shape_cast %5 : vector<1x8x32xf32> to vector<8x32xf32>
    %c0_4 = arith.constant 0 : index
    %c0_5 = arith.constant 0 : index
    %7 = vector.load %arg9[%c0_4, %c0_5] : memref<1x32xf32, #tpu.memory_space<vmem>>, vector<1x32xf32>
    %c0_6 = arith.constant 0 : index
    %c0_7 = arith.constant 0 : index
    %8 = vector.load %arg10[%c0_6, %c0_7] : memref<1x32xf32, #tpu.memory_space<vmem>>, vector<1x32xf32>
    %cst = arith.constant dense<0.000000e+00> : vector<8xf32>
    %9 = vector.multi_reduction <add>, %3, %cst [1] : vector<8x32xf32> to vector<8xf32>
    %10 = vector.shape_cast %9 : vector<8xf32> to vector<8x1xf32>
    %cst_8 = arith.constant 3.200000e+01 : f32
    %11 = vector.broadcast %cst_8 : f32 to vector<8x1xf32>
    %12 = arith.divf %10, %11 : vector<8x1xf32>
    %13 = vector.broadcast %12 : vector<8x1xf32> to vector<8x32xf32>
    %14 = arith.subf %3, %13 : vector<8x32xf32>
    %15 = arith.mulf %14, %14 : vector<8x32xf32>
    %cst_9 = arith.constant dense<0.000000e+00> : vector<8xf32>
    %16 = vector.multi_reduction <add>, %15, %cst_9 [1] : vector<8x32xf32> to vector<8xf32>
    %17 = vector.shape_cast %16 : vector<8xf32> to vector<8x1xf32>
    %cst_10 = arith.constant 3.200000e+01 : f32
    %18 = vector.broadcast %cst_10 : f32 to vector<8x1xf32>
    %19 = arith.divf %17, %18 : vector<8x1xf32>
    %20 = vector.broadcast %12 : vector<8x1xf32> to vector<8x32xf32>
    %21 = arith.subf %3, %20 : vector<8x32xf32>
    %cst_11 = arith.constant 9.99999974E-6 : f32
    %22 = vector.broadcast %cst_11 : f32 to vector<8x1xf32>
    %23 = arith.addf %19, %22 : vector<8x1xf32>
    %24 = math.rsqrt %23 : vector<8x1xf32>
    %25 = vector.broadcast %24 : vector<8x1xf32> to vector<8x32xf32>
    %26 = arith.mulf %21, %25 : vector<8x32xf32>
    %27 = vector.broadcast %7 : vector<1x32xf32> to vector<8x32xf32>
    %28 = arith.mulf %26, %27 : vector<8x32xf32>
    %29 = vector.broadcast %8 : vector<1x32xf32> to vector<8x32xf32>
    %30 = arith.addf %28, %29 : vector<8x32xf32>
    %cst_12 = arith.constant dense<0.000000e+00> : vector<8xf32>
    %31 = vector.multi_reduction <add>, %6, %cst_12 [1] : vector<8x32xf32> to vector<8xf32>
    %32 = vector.shape_cast %31 : vector<8xf32> to vector<8x1xf32>
    %cst_13 = arith.constant 3.200000e+01 : f32
    %33 = vector.broadcast %cst_13 : f32 to vector<8x1xf32>
    %34 = arith.divf %32, %33 : vector<8x1xf32>
    %35 = vector.broadcast %34 : vector<8x1xf32> to vector<8x32xf32>
    %36 = arith.subf %6, %35 : vector<8x32xf32>
    %37 = arith.mulf %36, %36 : vector<8x32xf32>
    %cst_14 = arith.constant dense<0.000000e+00> : vector<8xf32>
    %38 = vector.multi_reduction <add>, %37, %cst_14 [1] : vector<8x32xf32> to vector<8xf32>
    %39 = vector.shape_cast %38 : vector<8xf32> to vector<8x1xf32>
    %cst_15 = arith.constant 3.200000e+01 : f32
    %40 = vector.broadcast %cst_15 : f32 to vector<8x1xf32>
    %41 = arith.divf %39, %40 : vector<8x1xf32>
    %42 = vector.broadcast %34 : vector<8x1xf32> to vector<8x32xf32>
    %43 = arith.subf %6, %42 : vector<8x32xf32>
    %cst_16 = arith.constant 9.99999974E-6 : f32
    %44 = vector.broadcast %cst_16 : f32 to vector<8x1xf32>
    %45 = arith.addf %41, %44 : vector<8x1xf32>
    %46 = math.rsqrt %45 : vector<8x1xf32>
    %47 = vector.broadcast %46 : vector<8x1xf32> to vector<8x32xf32>
    %48 = arith.mulf %43, %47 : vector<8x32xf32>
    %49 = vector.broadcast %7 : vector<1x32xf32> to vector<8x32xf32>
    %50 = arith.mulf %48, %49 : vector<8x32xf32>
    %51 = vector.broadcast %8 : vector<1x32xf32> to vector<8x32xf32>
    %52 = arith.addf %50, %51 : vector<8x32xf32>
    %53 = arith.truncf %30 : vector<8x32xf32> to vector<8x32xbf16>
    %54 = vector.shape_cast %53 : vector<8x32xbf16> to vector<1x8x32xbf16>
    %55 = vector.shape_cast %54 : vector<1x8x32xbf16> to vector<1x8x32xbf16>
    %56 = vector.broadcast %55 : vector<1x8x32xbf16> to vector<8x8x32xbf16>
    %c0_17 = arith.constant 0 : index
    %c0_18 = arith.constant 0 : index
    %c0_19 = arith.constant 0 : index
    %57 = vector.load %arg5[%c0_17, %c0_18, %c0_19] : memref<8x32x8xbf16, #tpu.memory_space<vmem>>, vector<8x32x8xbf16>
    %cst_20 = arith.constant dense<0.000000e+00> : vector<8x8x8xf32>
    %58 = tpu.matmul %56, %57, %cst_20 {dimension_numbers = #tpu.dot_dimension_numbers<[2], [1], [1], [2], [0, 0, 0, 1, 1, 2], [0], [0]>} : vector<8x8x32xbf16>, vector<8x32x8xbf16>, vector<8x8x8xf32> -> vector<8x8x8xf32>
    %c0_21 = arith.constant 0 : index
    %c0_22 = arith.constant 0 : index
    %c0_23 = arith.constant 0 : index
    %59 = vector.load %arg6[%c0_21, %c0_22, %c0_23] : memref<8x1x8xf32, #tpu.memory_space<vmem>>, vector<8x1x8xf32>
    %60 = vector.broadcast %59 : vector<8x1x8xf32> to vector<8x8x8xf32>
    %61 = arith.addf %58, %60 : vector<8x8x8xf32>
    %62 = vector.extract_strided_slice %61 {offsets = [0, 0, 0], sizes = [4, 8, 8], strides = [1, 1, 1]} : vector<8x8x8xf32> to vector<4x8x8xf32>
    %63 = arith.truncf %62 : vector<4x8x8xf32> to vector<4x8x8xbf16>
    %64 = vector.extract_strided_slice %61 {offsets = [4, 0, 0], sizes = [4, 8, 8], strides = [1, 1, 1]} : vector<8x8x8xf32> to vector<4x8x8xf32>
    %65 = arith.truncf %64 : vector<4x8x8xf32> to vector<4x8x8xbf16>
    %66 = arith.truncf %52 : vector<8x32xf32> to vector<8x32xbf16>
    %67 = vector.shape_cast %66 : vector<8x32xbf16> to vector<1x8x32xbf16>
    %68 = vector.shape_cast %67 : vector<1x8x32xbf16> to vector<1x8x32xbf16>
    %69 = vector.broadcast %68 : vector<1x8x32xbf16> to vector<4x8x32xbf16>
    %c0_24 = arith.constant 0 : index
    %c0_25 = arith.constant 0 : index
    %c0_26 = arith.constant 0 : index
    %70 = vector.load %arg3[%c0_24, %c0_25, %c0_26] : memref<4x32x8xbf16, #tpu.memory_space<vmem>>, vector<4x32x8xbf16>
    %cst_27 = arith.constant dense<0.000000e+00> : vector<4x8x8xf32>
    %71 = tpu.matmul %69, %70, %cst_27 {dimension_numbers = #tpu.dot_dimension_numbers<[2], [1], [1], [2], [0, 0, 0, 1, 1, 2], [0], [0]>} : vector<4x8x32xbf16>, vector<4x32x8xbf16>, vector<4x8x8xf32> -> vector<4x8x8xf32>
    %c0_28 = arith.constant 0 : index
    %c0_29 = arith.constant 0 : index
    %c0_30 = arith.constant 0 : index
    %72 = vector.load %arg4[%c0_28, %c0_29, %c0_30] : memref<4x1x8xf32, #tpu.memory_space<vmem>>, vector<4x1x8xf32>
    %73 = vector.broadcast %72 : vector<4x1x8xf32> to vector<4x8x8xf32>
    %74 = arith.addf %71, %73 : vector<4x8x8xf32>
    %75 = arith.truncf %74 : vector<4x8x8xf32> to vector<4x8x8xbf16>
    %cst_31 = arith.constant dense<0.000000e+00> : vector<4x8x8xf32>
    %76 = tpu.matmul %75, %63, %cst_31 {dimension_numbers = #tpu.dot_dimension_numbers<[2], [2], [1], [1], [0, 0, 0, 1, 1, 1], [0], [0]>} : vector<4x8x8xbf16>, vector<4x8x8xbf16>, vector<4x8x8xf32> -> vector<4x8x8xf32>
    %cst_32 = arith.constant 0.176776692 : f32
    %77 = vector.broadcast %cst_32 : f32 to vector<4x8x8xf32>
    %78 = arith.mulf %76, %77 : vector<4x8x8xf32>
    %79 = tpu.iota {dimensions = array<i32: 0>} : vector<8x8xi32>
    %80 = vector.broadcast %1 : i32 to vector<8x8xi32>
    %81 = arith.addi %80, %79 : vector<8x8xi32>
    %82 = tpu.iota {dimensions = array<i32: 1>} : vector<8x8xi32>
    %83 = arith.cmpi sle, %82, %81 : vector<8x8xi32>
    %84 = vector.shape_cast %83 : vector<8x8xi1> to vector<1x8x8xi1>
    %cst_33 = arith.constant -1.000000e+30 : f32
    %85 = vector.shape_cast %84 : vector<1x8x8xi1> to vector<1x8x8xi1>
    %86 = vector.broadcast %85 : vector<1x8x8xi1> to vector<4x8x8xi1>
    %87 = vector.broadcast %cst_33 : f32 to vector<4x8x8xf32>
    %88 = arith.select %86, %78, %87 : vector<4x8x8xi1>, vector<4x8x8xf32>
    %cst_34 = arith.constant dense<0xFF800000> : vector<4x8xf32>
    %89 = vector.multi_reduction <maximumf>, %88, %cst_34 [2] : vector<4x8x8xf32> to vector<4x8xf32>
    %90 = vector.shape_cast %89 : vector<4x8xf32> to vector<4x8x1xf32>
    %91 = vector.broadcast %90 : vector<4x8x1xf32> to vector<4x8x8xf32>
    %92 = arith.subf %88, %91 : vector<4x8x8xf32>
    %93 = math.exp %92 : vector<4x8x8xf32>
    %cst_35 = arith.constant dense<0.000000e+00> : vector<4x8xf32>
    %94 = vector.multi_reduction <add>, %93, %cst_35 [2] : vector<4x8x8xf32> to vector<4x8xf32>
    %95 = vector.shape_cast %94 : vector<4x8xf32> to vector<4x8x1xf32>
    %96 = tpu.reciprocal %95 {approx = true} : vector<4x8x1xf32> -> vector<4x8x1xf32>
    %97 = vector.broadcast %96 : vector<4x8x1xf32> to vector<4x8x8xf32>
    %98 = arith.mulf %93, %97 : vector<4x8x8xf32>
    %99 = arith.truncf %98 : vector<4x8x8xf32> to vector<4x8x8xbf16>
    %cst_36 = arith.constant dense<0.000000e+00> : vector<4x8x8xf32>
    %100 = tpu.matmul %99, %65, %cst_36 {dimension_numbers = #tpu.dot_dimension_numbers<[2], [1], [1], [2], [0, 0, 0, 1, 1, 2], [0], [0]>} : vector<4x8x8xbf16>, vector<4x8x8xbf16>, vector<4x8x8xf32> -> vector<4x8x8xf32>
    %101 = arith.truncf %100 : vector<4x8x8xf32> to vector<4x8x8xbf16>
    %c0_37 = arith.constant 0 : index
    %c0_38 = arith.constant 0 : index
    %c0_39 = arith.constant 0 : index
    %102 = vector.load %arg7[%c0_37, %c0_38, %c0_39] : memref<4x8x32xbf16, #tpu.memory_space<vmem>>, vector<4x8x32xbf16>
    %cst_40 = arith.constant dense<0.000000e+00> : vector<4x8x32xf32>
    %103 = tpu.matmul %101, %102, %cst_40 {dimension_numbers = #tpu.dot_dimension_numbers<[2], [1], [1], [2], [0, 0, 0, 1, 1, 2], [0], [0]>} : vector<4x8x8xbf16>, vector<4x8x32xbf16>, vector<4x8x32xf32> -> vector<4x8x32xf32>
    %cst_41 = arith.constant dense<0.000000e+00> : vector<8x32xf32>
    %104 = vector.multi_reduction <add>, %103, %cst_41 [0] : vector<4x8x32xf32> to vector<8x32xf32>
    %c0_42 = arith.constant 0 : index
    %c0_43 = arith.constant 0 : index
    %105 = vector.load %arg8[%c0_42, %c0_43] : memref<1x32xf32, #tpu.memory_space<vmem>>, vector<1x32xf32>
    %106 = vector.broadcast %105 : vector<1x32xf32> to vector<8x32xf32>
    %107 = arith.addf %104, %106 : vector<8x32xf32>
    %108 = arith.addf %6, %107 : vector<8x32xf32>
    %c0_44 = arith.constant 0 : index
    %c0_45 = arith.constant 0 : index
    %109 = vector.load %arg11[%c0_44, %c0_45] : memref<1x32xf32, #tpu.memory_space<vmem>>, vector<1x32xf32>
    %c0_46 = arith.constant 0 : index
    %c0_47 = arith.constant 0 : index
    %110 = vector.load %arg12[%c0_46, %c0_47] : memref<1x32xf32, #tpu.memory_space<vmem>>, vector<1x32xf32>
    %cst_48 = arith.constant dense<0.000000e+00> : vector<8xf32>
    %111 = vector.multi_reduction <add>, %108, %cst_48 [1] : vector<8x32xf32> to vector<8xf32>
    %112 = vector.shape_cast %111 : vector<8xf32> to vector<8x1xf32>
    %cst_49 = arith.constant 3.200000e+01 : f32
    %113 = vector.broadcast %cst_49 : f32 to vector<8x1xf32>
    %114 = arith.divf %112, %113 : vector<8x1xf32>
    %115 = vector.broadcast %114 : vector<8x1xf32> to vector<8x32xf32>
    %116 = arith.subf %108, %115 : vector<8x32xf32>
    %117 = arith.mulf %116, %116 : vector<8x32xf32>
    %cst_50 = arith.constant dense<0.000000e+00> : vector<8xf32>
    %118 = vector.multi_reduction <add>, %117, %cst_50 [1] : vector<8x32xf32> to vector<8xf32>
    %119 = vector.shape_cast %118 : vector<8xf32> to vector<8x1xf32>
    %cst_51 = arith.constant 3.200000e+01 : f32
    %120 = vector.broadcast %cst_51 : f32 to vector<8x1xf32>
    %121 = arith.divf %119, %120 : vector<8x1xf32>
    %122 = vector.broadcast %114 : vector<8x1xf32> to vector<8x32xf32>
    %123 = arith.subf %108, %122 : vector<8x32xf32>
    %cst_52 = arith.constant 9.99999974E-6 : f32
    %124 = vector.broadcast %cst_52 : f32 to vector<8x1xf32>
    %125 = arith.addf %121, %124 : vector<8x1xf32>
    %126 = math.rsqrt %125 : vector<8x1xf32>
    %127 = vector.broadcast %126 : vector<8x1xf32> to vector<8x32xf32>
    %128 = arith.mulf %123, %127 : vector<8x32xf32>
    %129 = vector.broadcast %109 : vector<1x32xf32> to vector<8x32xf32>
    %130 = arith.mulf %128, %129 : vector<8x32xf32>
    %131 = vector.broadcast %110 : vector<1x32xf32> to vector<8x32xf32>
    %132 = arith.addf %130, %131 : vector<8x32xf32>
    %133 = arith.truncf %132 : vector<8x32xf32> to vector<8x32xbf16>
    %c0_53 = arith.constant 0 : index
    %c0_54 = arith.constant 0 : index
    %134 = vector.load %arg13[%c0_53, %c0_54] : memref<32x128xbf16, #tpu.memory_space<vmem>>, vector<32x128xbf16>
    %cst_55 = arith.constant dense<0.000000e+00> : vector<8x128xf32>
    %135 = tpu.matmul %133, %134, %cst_55 {dimension_numbers = #tpu.dot_dimension_numbers<[1], [0], [0], [1], [0, 0, 1, 1], [], []>} : vector<8x32xbf16>, vector<32x128xbf16>, vector<8x128xf32> -> vector<8x128xf32>
    %c0_56 = arith.constant 0 : index
    %c0_57 = arith.constant 0 : index
    %136 = vector.load %arg14[%c0_56, %c0_57] : memref<1x128xf32, #tpu.memory_space<vmem>>, vector<1x128xf32>
    %137 = vector.broadcast %136 : vector<1x128xf32> to vector<8x128xf32>
    %138 = arith.addf %135, %137 : vector<8x128xf32>
    %139 = arith.mulf %138, %138 : vector<8x128xf32>
    %cst_58 = arith.constant 5.000000e-01 : f32
    %140 = vector.broadcast %cst_58 : f32 to vector<8x128xf32>
    %141 = arith.mulf %140, %138 : vector<8x128xf32>
    %cst_59 = arith.constant 0.662852466 : f32
    %142 = vector.broadcast %cst_59 : f32 to vector<8x128xf32>
    %143 = arith.mulf %142, %138 : vector<8x128xf32>
    %cst_60 = arith.constant 4.471500e-02 : f32
    %144 = vector.broadcast %cst_60 : f32 to vector<8x128xf32>
    %145 = arith.mulf %144, %139 : vector<8x128xf32>
    %cst_61 = arith.constant 1.000000e+00 : f32
    %146 = vector.broadcast %cst_61 : f32 to vector<8x128xf32>
    %147 = arith.addf %146, %145 : vector<8x128xf32>
    %148 = arith.mulf %143, %147 : vector<8x128xf32>
    %cst_62 = arith.constant 1.000000e+00 : f32
    %149 = vector.broadcast %cst_62 : f32 to vector<8x128xf32>
    %150 = arith.addf %149, %148 : vector<8x128xf32>
    %151 = arith.mulf %141, %150 : vector<8x128xf32>
    %152 = arith.truncf %151 : vector<8x128xf32> to vector<8x128xbf16>
    %c0_63 = arith.constant 0 : index
    %c0_64 = arith.constant 0 : index
    %153 = vector.load %arg15[%c0_63, %c0_64] : memref<128x32xbf16, #tpu.memory_space<vmem>>, vector<128x32xbf16>
    %cst_65 = arith.constant dense<0.000000e+00> : vector<8x32xf32>
    %154 = tpu.matmul %152, %153, %cst_65 {dimension_numbers = #tpu.dot_dimension_numbers<[1], [0], [0], [1], [0, 0, 1, 1], [], []>} : vector<8x128xbf16>, vector<128x32xbf16>, vector<8x32xf32> -> vector<8x32xf32>
    %c0_66 = arith.constant 0 : index
    %c0_67 = arith.constant 0 : index
    %155 = vector.load %arg16[%c0_66, %c0_67] : memref<1x32xf32, #tpu.memory_space<vmem>>, vector<1x32xf32>
    %156 = vector.broadcast %155 : vector<1x32xf32> to vector<8x32xf32>
    %157 = arith.addf %154, %156 : vector<8x32xf32>
    %158 = arith.addf %132, %157 : vector<8x32xf32>
    %c0_68 = arith.constant 0 : index
    %c0_69 = arith.constant 0 : index
    %c0_70 = arith.constant 0 : index
    %159 = vector.load %arg17[%c0_68, %c0_69, %c0_70] : memref<1x8x32xf32, #tpu.memory_space<vmem>>, vector<1x8x32xf32>
    %160 = vector.shape_cast %159 : vector<1x8x32xf32> to vector<8x32xf32>
    %161 = vector.shape_cast %158 : vector<8x32xf32> to vector<1x8x32xf32>
    tpu.vector_store %arg17[%c0_68, %c0_69, %c0_70], %161 {strides = array<i32>} : memref<1x8x32xf32, #tpu.memory_space<vmem>>, vector<1x8x32xf32>,
    return
  }
  func.func @transform_0(%arg0: i32, %arg1: i32) -> (i32, i32, i32) {
    %c0_i32 = arith.constant 0 : i32
    %c0_i32_0 = arith.constant 0 : i32
    %c0_i32_1 = arith.constant 0 : i32
    return %arg0, %c0_i32, %c0_i32_0 : i32, i32, i32
  }
  func.func @transform_1(%arg0: i32, %arg1: i32) -> (i32, i32, i32) {
    %c0_i32 = arith.constant 0 : i32
    %c0_i32_0 = arith.constant 0 : i32
    %c0_i32_1 = arith.constant 0 : i32
    %c0_i32_2 = arith.constant 0 : i32
    return %c0_i32, %c0_i32_0, %c0_i32_1 : i32, i32, i32
  }
  func.func @transform_2(%arg0: i32, %arg1: i32) -> (i32, i32, i32) {
    %c0_i32 = arith.constant 0 : i32
    %c0_i32_0 = arith.constant 0 : i32
    %c0_i32_1 = arith.constant 0 : i32
    %c0_i32_2 = arith.constant 0 : i32
    return %c0_i32, %c0_i32_0, %c0_i32_1 : i32, i32, i32
  }
  func.func @transform_3(%arg0: i32, %arg1: i32) -> (i32, i32, i32) {
    %c0_i32 = arith.constant 0 : i32
    %c0_i32_0 = arith.constant 0 : i32
    %c0_i32_1 = arith.constant 0 : i32
    %c0_i32_2 = arith.constant 0 : i32
    return %c0_i32, %c0_i32_0, %c0_i32_1 : i32, i32, i32
  }
  func.func @transform_4(%arg0: i32, %arg1: i32) -> (i32, i32, i32) {
    %c0_i32 = arith.constant 0 : i32
    %c0_i32_0 = arith.constant 0 : i32
    %c0_i32_1 = arith.constant 0 : i32
    %c0_i32_2 = arith.constant 0 : i32
    return %c0_i32, %c0_i32_0, %c0_i32_1 : i32, i32, i32
  }
  func.func @transform_5(%arg0: i32, %arg1: i32) -> (i32, i32, i32) {
    %c0_i32 = arith.constant 0 : i32
    %c0_i32_0 = arith.constant 0 : i32
    %c0_i32_1 = arith.constant 0 : i32
    %c0_i32_2 = arith.constant 0 : i32
    return %c0_i32, %c0_i32_0, %c0_i32_1 : i32, i32, i32
  }
  func.func @transform_6(%arg0: i32, %arg1: i32) -> (i32, i32) {
    %c0_i32 = arith.constant 0 : i32
    %c0_i32_0 = arith.constant 0 : i32
    %c0_i32_1 = arith.constant 0 : i32
    return %c0_i32, %c0_i32_0 : i32, i32
  }
  func.func @transform_7(%arg0: i32, %arg1: i32) -> (i32, i32) {
    %c0_i32 = arith.constant 0 : i32
    %c0_i32_0 = arith.constant 0 : i32
    %c0_i32_1 = arith.constant 0 : i32
    return %c0_i32, %c0_i32_0 : i32, i32
  }
  func.func @transform_8(%arg0: i32, %arg1: i32) -> (i32, i32) {
    %c0_i32 = arith.constant 0 : i32
    %c0_i32_0 = arith.constant 0 : i32
    %c0_i32_1 = arith.constant 0 : i32
    return %c0_i32, %c0_i32_0 : i32, i32
  }
  func.func @transform_9(%arg0: i32, %arg1: i32) -> (i32, i32) {
    %c0_i32 = arith.constant 0 : i32
    %c0_i32_0 = arith.constant 0 : i32
    %c0_i32_1 = arith.constant 0 : i32
    return %c0_i32, %c0_i32_0 : i32, i32
  }
  func.func @transform_10(%arg0: i32, %arg1: i32) -> (i32, i32) {
    %c0_i32 = arith.constant 0 : i32
    %c0_i32_0 = arith.constant 0 : i32
    %c0_i32_1 = arith.constant 0 : i32
    return %c0_i32, %c0_i32_0 : i32, i32
  }
  func.func @transform_11(%arg0: i32, %arg1: i32) -> (i32, i32) {
    %c0_i32 = arith.constant 0 : i32
    %c0_i32_0 = arith.constant 0 : i32
    %c0_i32_1 = arith.constant 0 : i32
    return %c0_i32, %c0_i32_0 : i32, i32
  }
  func.func @transform_12(%arg0: i32, %arg1: i32) -> (i32, i32) {
    %c0_i32 = arith.constant 0 : i32
    %c0_i32_0 = arith.constant 0 : i32
    %c0_i32_1 = arith.constant 0 : i32
    return %c0_i32, %c0_i32_0 : i32, i32
  }
  func.func @transform_13(%arg0: i32, %arg1: i32) -> (i32, i32) {
    %c0_i32 = arith.constant 0 : i32
    %c0_i32_0 = arith.constant 0 : i32
    %c0_i32_1 = arith.constant 0 : i32
    return %c0_i32, %c0_i32_0 : i32, i32
  }
  func.func @transform_14(%arg0: i32, %arg1: i32) -> (i32, i32) {
    %c0_i32 = arith.constant 0 : i32
    %c0_i32_0 = arith.constant 0 : i32
    %c0_i32_1 = arith.constant 0 : i32
    return %c0_i32, %c0_i32_0 : i32, i32
  }
  func.func @transform_15(%arg0: i32, %arg1: i32) -> (i32, i32, i32) {
    %c0_i32 = arith.constant 0 : i32
    %c0_i32_0 = arith.constant 0 : i32
    return %arg0, %arg1, %c0_i32 : i32, i32, i32
  }
}

</mosaic_0001>

<llo_original>
// kernel: tpu_custom_call.1
$region0: #{tpu_custom_call.1}
  #allocation0 [shape = 'u32[]', space=smem, size = 0x4, offset = 0x4, fixed_abs, tag = 'smem constant byte address 0x4 - core index']
  #allocation1 [shape = 'u32[144,128]{1,0:T(1,128)}', space=vmem, size = 0x12000, scoped, tag = 'internal scratch']
  %s0 = inlined_call_operand.vmem [shape: f32[2,8,32], index: 0, kind: input, shape index: {}]
  %s1 = inlined_call_operand.vmem [shape: bf16[4,32,8], index: 1, kind: input, shape index: {}]
  %s2 = inlined_call_operand.vmem [shape: f32[4,1,8], index: 2, kind: input, shape index: {}]
  %s3 = inlined_call_operand.vmem [shape: bf16[8,32,8], index: 3, kind: input, shape index: {}]
  %s4 = inlined_call_operand.vmem [shape: f32[8,1,8], index: 4, kind: input, shape index: {}]
  %s5 = inlined_call_operand.vmem [shape: bf16[4,8,32], index: 5, kind: input, shape index: {}]
  %s6 = inlined_call_operand.vmem [shape: f32[1,32], index: 6, kind: input, shape index: {}]
  %s7 = inlined_call_operand.vmem [shape: f32[1,32], index: 7, kind: input, shape index: {}]
  %s8 = inlined_call_operand.vmem [shape: f32[1,32], index: 8, kind: input, shape index: {}]
  %s9 = inlined_call_operand.vmem [shape: f32[1,32], index: 9, kind: input, shape index: {}]
  %s10 = inlined_call_operand.vmem [shape: f32[1,32], index: 10, kind: input, shape index: {}]
  %s11 = inlined_call_operand.vmem [shape: bf16[32,128], index: 11, kind: input, shape index: {}]
  %s12 = inlined_call_operand.vmem [shape: f32[1,128], index: 12, kind: input, shape index: {}]
  %s13 = inlined_call_operand.vmem [shape: bf16[128,32], index: 13, kind: input, shape index: {}]
  %s14 = inlined_call_operand.vmem [shape: f32[1,32], index: 14, kind: input, shape index: {}]
  %s15 = inlined_call_operand.hbm [shape: f32[2,8,32], index: 15, kind: output, shape index: {}]
  %s16 = sld [smem:[#allocation0]]
  $region93: #{tpu_custom_call.1} parent=0
    _
  %s18 = ssub.s32 1, %s16
  %s19 = scalar_select 0, %s18, %s16
  $region1: #{tpu_custom_call.1} parent=0
    #allocation2 [shape = 'u8[8192]{0}', space=vmem, size = 0x2000, scoped, tag = 'output window, operand 0']
    #allocation3 [shape = 's32[2]{0}', space=sflag, size = 0x8, scoped, tag = 'scoped memory for tpu_custom_call.1']
    %20 = vsyncpa [#allocation3], 0
    %s21 = scalar_lea.sflag [#allocation3], 1
    %22 = vsyncpa %s21, 0
    loop: start=0, step=1, limit=4
    $region2: #{tpu_custom_call.1} parent=1 // loop_pre_header
      _
    $region3: #{tpu_custom_call.1} parent=1 // loop_header
      %s24 = sphi 0, %s28
      %p25 = scmp.ge.s32.totalorder %s24, 4
      %s31 = sphi 0, %s43
      %s32 = sphi 0, %s39
      %s33 = sphi 0, %s31
      %s34 = sphi 0, %s32
      %s35 = sphi 0, %s33
      %s36 = sphi 0, %s34
      %s46 = sphi 0, %s48
      %s49 = sphi 0, %s46
      %s50 = sphi 0, %s49
      %s66 = sphi 0, %s50
      %s70 = sphi 0, %s70
      %s72 = sphi 0, %s70
      %s73 = sphi 0, %s72
      %s87 = sphi 0, %s73
      %s91 = sphi 0, %s91
      %s93 = sphi 0, %s91
      %s94 = sphi 0, %s93
      %s108 = sphi 0, %s94
      %s112 = sphi 0, %s112
      %s114 = sphi 0, %s112
      %s115 = sphi 0, %s114
      %s129 = sphi 0, %s115
      %s133 = sphi 0, %s133
      %s135 = sphi 0, %s133
      %s136 = sphi 0, %s135
      %s150 = sphi 0, %s136
      %s154 = sphi 0, %s154
      %s156 = sphi 0, %s154
      %s157 = sphi 0, %s156
      %s171 = sphi 0, %s157
      %s175 = sphi 0, %s175
      %s177 = sphi 0, %s175
      %s178 = sphi 0, %s177
      %s192 = sphi 0, %s178
      %s196 = sphi 0, %s196
      %s198 = sphi 0, %s196
      %s199 = sphi 0, %s198
      %s213 = sphi 0, %s199
      %s217 = sphi 0, %s217
      %s219 = sphi 0, %s217
      %s220 = sphi 0, %s219
      %s234 = sphi 0, %s220
      %s238 = sphi 0, %s238
      %s240 = sphi 0, %s238
      %s241 = sphi 0, %s240
      %s255 = sphi 0, %s241
      %s259 = sphi 0, %s259
      %s261 = sphi 0, %s259
      %s262 = sphi 0, %s261
      %s276 = sphi 0, %s262
      %s280 = sphi 0, %s280
      %s282 = sphi 0, %s280
      %s283 = sphi 0, %s282
      %s297 = sphi 0, %s283
      %s301 = sphi 0, %s301
      %s303 = sphi 0, %s301
      %s304 = sphi 0, %s303
      %s318 = sphi 0, %s304
      %s322 = sphi 0, %s322
      %s324 = sphi 0, %s322
      %s325 = sphi 0, %s324
      %s339 = sphi 0, %s325
      %s343 = sphi 0, %s343
      %s345 = sphi 0, %s343
      %s346 = sphi 0, %s345
      %s360 = sphi 0, %s346
      %s368 = sphi 0, %s370
      %s371 = sphi 0, %s368
      %s372 = sphi 0, %s371
      %s388 = sphi 0, %s372
    $region4: #{tpu_custom_call.1} parent=1 // loop_header_branch
      %27 = sbr.rel (%p25) target = $region8
    $region5: #{tpu_custom_call.1} parent=1 // loop_body
      %s29 = ssub.s32 %s24, 1
      %s30 = ssub.s32 %s24, 2
      %s37 = sadd.s32 1, %s32
      %p38 = scmp.ge.s32.totalorder %s37, 1
      %s39 = scalar_select %p38, 0, %s37
      %s40 = sadd.s32 1, %s31
      %s41 = scalar_select %p38, %s40, %s31
      %p42 = scmp.ge.s32.totalorder %s41, 2
      %s43 = scalar_select %p42, 0, %s41
      %s44 = ssub.s32 %s31, %s43
      %p45 = scmp.eq.s32.totalorder %s44, 0
      %s47 = sadd.s32 %s46, 1
      %s48 = scalar_select %p45, %s46, %s47
      %p51 = pneg %p45
      %p52 = scmp.eq.s32.totalorder %s24, 1
      %p53 = por %p51, %p52
      %p54 = scmp.ne.s32.totalorder %s46, %s49
      %p55 = scmp.eq.s32.totalorder %s24, 0
      %p56 = por %p54, %p55
      %p57 = scmp.ne.s32.totalorder %s46, %s49
      %p58 = scmp.eq.s32.totalorder %s29, 1
      %p59 = por %p57, %p58
      %p60 = scmp.ne.s32.totalorder %s49, %s50
      %p61 = scmp.eq.s32.totalorder %s29, 0
      %p62 = por %p60, %p61
      %p63 = scmp.ne.s32.totalorder %s49, %s50
      %p64 = scmp.eq.s32.totalorder %s30, 1
      %p65 = por %p63, %p64
      %p67 = scmp.ne.s32.totalorder %s50, %s66
      %p68 = scmp.eq.s32.totalorder %s30, 0
      %p69 = por %p67, %p68
      %s71 = sadd.s32 %s70, 1
      %p74 = scmp.eq.s32.totalorder %s24, 1
      %p75 = scmp.ne.s32.totalorder %s70, %s72
      %p76 = scmp.eq.s32.totalorder %s24, 0
      %p77 = por %p75, %p76
      %p78 = scmp.ne.s32.totalorder %s70, %s72
      %p79 = scmp.eq.s32.totalorder %s29, 1
      %p80 = por %p78, %p79
      %p81 = scmp.ne.s32.totalorder %s72, %s73
      %p82 = scmp.eq.s32.totalorder %s29, 0
      %p83 = por %p81, %p82
      %p84 = scmp.ne.s32.totalorder %s72, %s73
      %p85 = scmp.eq.s32.totalorder %s30, 1
      %p86 = por %p84, %p85
      %p88 = scmp.ne.s32.totalorder %s73, %s87
      %p89 = scmp.eq.s32.totalorder %s30, 0
      %p90 = por %p88, %p89
      %s92 = sadd.s32 %s91, 1
      %p95 = scmp.eq.s32.totalorder %s24, 1
      %p96 = scmp.ne.s32.totalorder %s91, %s93
      %p97 = scmp.eq.s32.totalorder %s24, 0
      %p98 = por %p96, %p97
      %p99 = scmp.ne.s32.totalorder %s91, %s93
      %p100 = scmp.eq.s32.totalorder %s29, 1
      %p101 = por %p99, %p100
      %p102 = scmp.ne.s32.totalorder %s93, %s94
      %p103 = scmp.eq.s32.totalorder %s29, 0
      %p104 = por %p102, %p103
      %p105 = scmp.ne.s32.totalorder %s93, %s94
      %p106 = scmp.eq.s32.totalorder %s30, 1
      %p107 = por %p105, %p106
      %p109 = scmp.ne.s32.totalorder %s94, %s108
      %p110 = scmp.eq.s32.totalorder %s30, 0
      %p111 = por %p109, %p110
      %s113 = sadd.s32 %s112, 1
      %p116 = scmp.eq.s32.totalorder %s24, 1
      %p117 = scmp.ne.s32.totalorder %s112, %s114
      %p118 = scmp.eq.s32.totalorder %s24, 0
      %p119 = por %p117, %p118
      %p120 = scmp.ne.s32.totalorder %s112, %s114
      %p121 = scmp.eq.s32.totalorder %s29, 1
      %p122 = por %p120, %p121
      %p123 = scmp.ne.s32.totalorder %s114, %s115
      %p124 = scmp.eq.s32.totalorder %s29, 0
      %p125 = por %p123, %p124
      %p126 = scmp.ne.s32.totalorder %s114, %s115
      %p127 = scmp.eq.s32.totalorder %s30, 1
      %p128 = por %p126, %p127
      %p130 = scmp.ne.s32.totalorder %s115, %s129
      %p131 = scmp.eq.s32.totalorder %s30, 0
      %p132 = por %p130, %p131
      %s134 = sadd.s32 %s133, 1
      %p137 = scmp.eq.s32.totalorder %s24, 1
      %p138 = scmp.ne.s32.totalorder %s133, %s135
      %p139 = scmp.eq.s32.totalorder %s24, 0
      %p140 = por %p138, %p139
      %p141 = scmp.ne.s32.totalorder %s133, %s135
      %p142 = scmp.eq.s32.totalorder %s29, 1
      %p143 = por %p141, %p142
      %p144 = scmp.ne.s32.totalorder %s135, %s136
      %p145 = scmp.eq.s32.totalorder %s29, 0
      %p146 = por %p144, %p145
      %p147 = scmp.ne.s32.totalorder %s135, %s136
      %p148 = scmp.eq.s32.totalorder %s30, 1
      %p149 = por %p147, %p148
      %p151 = scmp.ne.s32.totalorder %s136, %s150
      %p152 = scmp.eq.s32.totalorder %s30, 0
      %p153 = por %p151, %p152
      %s155 = sadd.s32 %s154, 1
      %p158 = scmp.eq.s32.totalorder %s24, 1
      %p159 = scmp.ne.s32.totalorder %s154, %s156
      %p160 = scmp.eq.s32.totalorder %s24, 0
      %p161 = por %p159, %p160
      %p162 = scmp.ne.s32.totalorder %s154, %s156
      %p163 = scmp.eq.s32.totalorder %s29, 1
      %p164 = por %p162, %p163
      %p165 = scmp.ne.s32.totalorder %s156, %s157
      %p166 = scmp.eq.s32.totalorder %s29, 0
      %p167 = por %p165, %p166
      %p168 = scmp.ne.s32.totalorder %s156, %s157
      %p169 = scmp.eq.s32.totalorder %s30, 1
      %p170 = por %p168, %p169
      %p172 = scmp.ne.s32.totalorder %s157, %s171
      %p173 = scmp.eq.s32.totalorder %s30, 0
      %p174 = por %p172, %p173
      %s176 = sadd.s32 %s175, 1
      %p179 = scmp.eq.s32.totalorder %s24, 1
      %p180 = scmp.ne.s32.totalorder %s175, %s177
      %p181 = scmp.eq.s32.totalorder %s24, 0
      %p182 = por %p180, %p181
      %p183 = scmp.ne.s32.totalorder %s175, %s177
      %p184 = scmp.eq.s32.totalorder %s29, 1
      %p185 = por %p183, %p184
      %p186 = scmp.ne.s32.totalorder %s177, %s178
      %p187 = scmp.eq.s32.totalorder %s29, 0
      %p188 = por %p186, %p187
      %p189 = scmp.ne.s32.totalorder %s177, %s178
      %p190 = scmp.eq.s32.totalorder %s30, 1
      %p191 = por %p189, %p190
      %p193 = scmp.ne.s32.totalorder %s178, %s192
      %p194 = scmp.eq.s32.totalorder %s30, 0
      %p195 = por %p193, %p194
      %s197 = sadd.s32 %s196, 1
      %p200 = scmp.eq.s32.totalorder %s24, 1
      %p201 = scmp.ne.s32.totalorder %s196, %s198
      %p202 = scmp.eq.s32.totalorder %s24, 0
      %p203 = por %p201, %p202
      %p204 = scmp.ne.s32.totalorder %s196, %s198
      %p205 = scmp.eq.s32.totalorder %s29, 1
      %p206 = por %p204, %p205
      %p207 = scmp.ne.s32.totalorder %s198, %s199
      %p208 = scmp.eq.s32.totalorder %s29, 0
      %p209 = por %p207, %p208
      %p210 = scmp.ne.s32.totalorder %s198, %s199
      %p211 = scmp.eq.s32.totalorder %s30, 1
      %p212 = por %p210, %p211
      %p214 = scmp.ne.s32.totalorder %s199, %s213
      %p215 = scmp.eq.s32.totalorder %s30, 0
      %p216 = por %p214, %p215
      %s218 = sadd.s32 %s217, 1
      %p221 = scmp.eq.s32.totalorder %s24, 1
      %p222 = scmp.ne.s32.totalorder %s217, %s219
      %p223 = scmp.eq.s32.totalorder %s24, 0
      %p224 = por %p222, %p223
      %p225 = scmp.ne.s32.totalorder %s217, %s219
      %p226 = scmp.eq.s32.totalorder %s29, 1
      %p227 = por %p225, %p226
      %p228 = scmp.ne.s32.totalorder %s219, %s220
      %p229 = scmp.eq.s32.totalorder %s29, 0
      %p230 = por %p228, %p229
      %p231 = scmp.ne.s32.totalorder %s219, %s220
      %p232 = scmp.eq.s32.totalorder %s30, 1
      %p233 = por %p231, %p232
      %p235 = scmp.ne.s32.totalorder %s220, %s234
      %p236 = scmp.eq.s32.totalorder %s30, 0
      %p237 = por %p235, %p236
      %s239 = sadd.s32 %s238, 1
      %p242 = scmp.eq.s32.totalorder %s24, 1
      %p243 = scmp.ne.s32.totalorder %s238, %s240
      %p244 = scmp.eq.s32.totalorder %s24, 0
      %p245 = por %p243, %p244
      %p246 = scmp.ne.s32.totalorder %s238, %s240
      %p247 = scmp.eq.s32.totalorder %s29, 1
      %p248 = por %p246, %p247
      %p249 = scmp.ne.s32.totalorder %s240, %s241
      %p250 = scmp.eq.s32.totalorder %s29, 0
      %p251 = por %p249, %p250
      %p252 = scmp.ne.s32.totalorder %s240, %s241
      %p253 = scmp.eq.s32.totalorder %s30, 1
      %p254 = por %p252, %p253
      %p256 = scmp.ne.s32.totalorder %s241, %s255
      %p257 = scmp.eq.s32.totalorder %s30, 0
      %p258 = por %p256, %p257
      %s260 = sadd.s32 %s259, 1
      %p263 = scmp.eq.s32.totalorder %s24, 1
      %p264 = scmp.ne.s32.totalorder %s259, %s261
      %p265 = scmp.eq.s32.totalorder %s24, 0
      %p266 = por %p264, %p265
      %p267 = scmp.ne.s32.totalorder %s259, %s261
      %p268 = scmp.eq.s32.totalorder %s29, 1
      %p269 = por %p267, %p268
      %p270 = scmp.ne.s32.totalorder %s261, %s262
      %p271 = scmp.eq.s32.totalorder %s29, 0
      %p272 = por %p270, %p271
      %p273 = scmp.ne.s32.totalorder %s261, %s262
      %p274 = scmp.eq.s32.totalorder %s30, 1
      %p275 = por %p273, %p274
      %p277 = scmp.ne.s32.totalorder %s262, %s276
      %p278 = scmp.eq.s32.totalorder %s30, 0
      %p279 = por %p277, %p278
      %s281 = sadd.s32 %s280, 1
      %p284 = scmp.eq.s32.totalorder %s24, 1
      %p285 = scmp.ne.s32.totalorder %s280, %s282
      %p286 = scmp.eq.s32.totalorder %s24, 0
      %p287 = por %p285, %p286
      %p288 = scmp.ne.s32.totalorder %s280, %s282
      %p289 = scmp.eq.s32.totalorder %s29, 1
      %p290 = por %p288, %p289
      %p291 = scmp.ne.s32.totalorder %s282, %s283
      %p292 = scmp.eq.s32.totalorder %s29, 0
      %p293 = por %p291, %p292
      %p294 = scmp.ne.s32.totalorder %s282, %s283
      %p295 = scmp.eq.s32.totalorder %s30, 1
      %p296 = por %p294, %p295
      %p298 = scmp.ne.s32.totalorder %s283, %s297
      %p299 = scmp.eq.s32.totalorder %s30, 0
      %p300 = por %p298, %p299
      %s302 = sadd.s32 %s301, 1
      %p305 = scmp.eq.s32.totalorder %s24, 1
      %p306 = scmp.ne.s32.totalorder %s301, %s303
      %p307 = scmp.eq.s32.totalorder %s24, 0
      %p308 = por %p306, %p307
      %p309 = scmp.ne.s32.totalorder %s301, %s303
      %p310 = scmp.eq.s32.totalorder %s29, 1
      %p311 = por %p309, %p310
      %p312 = scmp.ne.s32.totalorder %s303, %s304
      %p313 = scmp.eq.s32.totalorder %s29, 0
      %p314 = por %p312, %p313
      %p315 = scmp.ne.s32.totalorder %s303, %s304
      %p316 = scmp.eq.s32.totalorder %s30, 1
      %p317 = por %p315, %p316
      %p319 = scmp.ne.s32.totalorder %s304, %s318
      %p320 = scmp.eq.s32.totalorder %s30, 0
      %p321 = por %p319, %p320
      %s323 = sadd.s32 %s322, 1
      %p326 = scmp.eq.s32.totalorder %s24, 1
      %p327 = scmp.ne.s32.totalorder %s322, %s324
      %p328 = scmp.eq.s32.totalorder %s24, 0
      %p329 = por %p327, %p328
      %p330 = scmp.ne.s32.totalorder %s322, %s324
      %p331 = scmp.eq.s32.totalorder %s29, 1
      %p332 = por %p330, %p331
      %p333 = scmp.ne.s32.totalorder %s324, %s325
      %p334 = scmp.eq.s32.totalorder %s29, 0
      %p335 = por %p333, %p334
      %p336 = scmp.ne.s32.totalorder %s324, %s325
      %p337 = scmp.eq.s32.totalorder %s30, 1
      %p338 = por %p336, %p337
      %p340 = scmp.ne.s32.totalorder %s325, %s339
      %p341 = scmp.eq.s32.totalorder %s30, 0
      %p342 = por %p340, %p341
      %s344 = sadd.s32 %s343, 1
      %p347 = scmp.eq.s32.totalorder %s24, 1
      %p348 = scmp.ne.s32.totalorder %s343, %s345
      %p349 = scmp.eq.s32.totalorder %s24, 0
      %p350 = por %p348, %p349
      %p351 = scmp.ne.s32.totalorder %s343, %s345
      %p352 = scmp.eq.s32.totalorder %s29, 1
      %p353 = por %p351, %p352
      %p354 = scmp.ne.s32.totalorder %s345, %s346
      %p355 = scmp.eq.s32.totalorder %s29, 0
      %p356 = por %p354, %p355
      %p357 = scmp.ne.s32.totalorder %s345, %s346
      %p358 = scmp.eq.s32.totalorder %s30, 1
      %p359 = por %p357, %p358
      %p361 = scmp.ne.s32.totalorder %s346, %s360
      %p362 = scmp.eq.s32.totalorder %s30, 0
      %p363 = por %p361, %p362
      %s364 = ssub.s32 %s31, %s43
      %s365 = ssub.s32 %s32, %s39
      %s366 = sor.u32 %s364, %s365
      %p367 = scmp.eq.s32.totalorder %s366, 0
      %s369 = sadd.s32 %s368, 1
      %s370 = scalar_select %p367, %s368, %s369
      %p373 = pneg %p367
      %p374 = scmp.eq.s32.totalorder %s24, 1
      %p375 = por %p373, %p374
      %p376 = scmp.ne.s32.totalorder %s368, %s371
      %p377 = scmp.eq.s32.totalorder %s24, 0
      %p378 = por %p376, %p377
      %p379 = scmp.ne.s32.totalorder %s368, %s371
      %p380 = scmp.eq.s32.totalorder %s29, 1
      %p381 = por %p379, %p380
      %p382 = scmp.ne.s32.totalorder %s371, %s372
      %p383 = scmp.eq.s32.totalorder %s29, 0
      %p384 = por %p382, %p383
      %p385 = scmp.ne.s32.totalorder %s371, %s372
      %p386 = scmp.eq.s32.totalorder %s30, 1
      %p387 = por %p385, %p386
      %p389 = scmp.ne.s32.totalorder %s372, %s388
      %p390 = scmp.eq.s32.totalorder %s30, 0
      %p391 = por %p389, %p390
      %p392 = scmp.le.s32.totalorder 1, %s24
      %p393 = scmp.lt.s32.totalorder %s24, 3
      %p394 = pnand %p392, %p393
      %p395 = pneg %p394
      // Predicated region
      $region9: #{tpu_custom_call.1} parent=5 // pred_check
        _
      $region10: #{tpu_custom_call.1} parent=5 // pred_check_branch
        %397 = sbr.rel (%p394) target = $region12
      $region11: #{tpu_custom_call.1} parent=5 // pred_region
        %s398 = ssub.s32 %s24, 1
        // Predicated region
        $region13: #{tpu_custom_call.1} parent=11 // pred_check
          %p399 = pneg %p83
        $region14: #{tpu_custom_call.1} parent=11 // pred_check_branch
          %401 = sbr.rel (%p399) target = $region16
        $region15: #{tpu_custom_call.1} parent=11 // pred_region
          _
        $region16: #{tpu_custom_call.1} parent=11 // pred_fallthru
          _
        // Predicated region
        $region17: #{tpu_custom_call.1} parent=11 // pred_check
          %p402 = pneg %p104
        $region18: #{tpu_custom_call.1} parent=11 // pred_check_branch
          %404 = sbr.rel (%p402) target = $region20
        $region19: #{tpu_custom_call.1} parent=11 // pred_region
          _
        $region20: #{tpu_custom_call.1} parent=11 // pred_fallthru
          _
        // Predicated region
        $region21: #{tpu_custom_call.1} parent=11 // pred_check
          %p405 = pneg %p125
        $region22: #{tpu_custom_call.1} parent=11 // pred_check_branch
          %407 = sbr.rel (%p405) target = $region24
        $region23: #{tpu_custom_call.1} parent=11 // pred_region
          _
        $region24: #{tpu_custom_call.1} parent=11 // pred_fallthru
          _
        // Predicated region
        $region25: #{tpu_custom_call.1} parent=11 // pred_check
          %p408 = pneg %p146
        $region26: #{tpu_custom_call.1} parent=11 // pred_check_branch
          %410 = sbr.rel (%p408) target = $region28
        $region27: #{tpu_custom_call.1} parent=11 // pred_region
          _
        $region28: #{tpu_custom_call.1} parent=11 // pred_fallthru
          _
        // Predicated region
        $region29: #{tpu_custom_call.1} parent=11 // pred_check
          %p411 = pneg %p167
        $region30: #{tpu_custom_call.1} parent=11 // pred_check_branch
          %413 = sbr.rel (%p411) target = $region32
        $region31: #{tpu_custom_call.1} parent=11 // pred_region
          _
        $region32: #{tpu_custom_call.1} parent=11 // pred_fallthru
          _
        // Predicated region
        $region33: #{tpu_custom_call.1} parent=11 // pred_check
          %p414 = pneg %p188
        $region34: #{tpu_custom_call.1} parent=11 // pred_check_branch
          %416 = sbr.rel (%p414) target = $region36
        $region35: #{tpu_custom_call.1} parent=11 // pred_region
          _
        $region36: #{tpu_custom_call.1} parent=11 // pred_fallthru
          _
        // Predicated region
        $region37: #{tpu_custom_call.1} parent=11 // pred_check
          %p417 = pneg %p209
        $region38: #{tpu_custom_call.1} parent=11 // pred_check_branch
          %419 = sbr.rel (%p417) target = $region40
        $region39: #{tpu_custom_call.1} parent=11 // pred_region
          _
        $region40: #{tpu_custom_call.1} parent=11 // pred_fallthru
          _
        // Predicated region
        $region41: #{tpu_custom_call.1} parent=11 // pred_check
          %p420 = pneg %p230
        $region42: #{tpu_custom_call.1} parent=11 // pred_check_branch
          %422 = sbr.rel (%p420) target = $region44
        $region43: #{tpu_custom_call.1} parent=11 // pred_region
          _
        $region44: #{tpu_custom_call.1} parent=11 // pred_fallthru
          _
        // Predicated region
        $region45: #{tpu_custom_call.1} parent=11 // pred_check
          %p423 = pneg %p251
        $region46: #{tpu_custom_call.1} parent=11 // pred_check_branch
          %425 = sbr.rel (%p423) target = $region48
        $region47: #{tpu_custom_call.1} parent=11 // pred_region
          _
        $region48: #{tpu_custom_call.1} parent=11 // pred_fallthru
          _
        // Predicated region
        $region49: #{tpu_custom_call.1} parent=11 // pred_check
          %p426 = pneg %p272
        $region50: #{tpu_custom_call.1} parent=11 // pred_check_branch
          %428 = sbr.rel (%p426) target = $region52
        $region51: #{tpu_custom_call.1} parent=11 // pred_region
          _
        $region52: #{tpu_custom_call.1} parent=11 // pred_fallthru
          _
        // Predicated region
        $region53: #{tpu_custom_call.1} parent=11 // pred_check
          %p429 = pneg %p293
        $region54: #{tpu_custom_call.1} parent=11 // pred_check_branch
          %431 = sbr.rel (%p429) target = $region56
        $region55: #{tpu_custom_call.1} parent=11 // pred_region
          _
        $region56: #{tpu_custom_call.1} parent=11 // pred_fallthru
          _
        // Predicated region
        $region57: #{tpu_custom_call.1} parent=11 // pred_check
          %p432 = pneg %p314
        $region58: #{tpu_custom_call.1} parent=11 // pred_check_branch
          %434 = sbr.rel (%p432) target = $region60
        $region59: #{tpu_custom_call.1} parent=11 // pred_region
          _
        $region60: #{tpu_custom_call.1} parent=11 // pred_fallthru
          _
        // Predicated region
        $region61: #{tpu_custom_call.1} parent=11 // pred_check
          %p435 = pneg %p335
        $region62: #{tpu_custom_call.1} parent=11 // pred_check_branch
          %437 = sbr.rel (%p435) target = $region64
        $region63: #{tpu_custom_call.1} parent=11 // pred_region
          _
        $region64: #{tpu_custom_call.1} parent=11 // pred_fallthru
          _
        // Predicated region
        $region65: #{tpu_custom_call.1} parent=11 // pred_check
          %p438 = pneg %p356
        $region66: #{tpu_custom_call.1} parent=11 // pred_check_branch
          %440 = sbr.rel (%p438) target = $region68
        $region67: #{tpu_custom_call.1} parent=11 // pred_region
          _
        $region68: #{tpu_custom_call.1} parent=11 // pred_fallthru
          _
      $region12: #{tpu_custom_call.1} parent=5 // pred_fallthru
        _
      %p441 = scmp.lt.s32.totalorder %s24, 2
      // Predicated region
      $region69: #{tpu_custom_call.1} parent=5 // pred_check
        %p442 = pneg %p441
      $region70: #{tpu_custom_call.1} parent=5 // pred_check_branch
        %444 = sbr.rel (%p442) target = $region72
      $region71: #{tpu_custom_call.1} parent=5 // pred_region
        // Predicated region
        $region73: #{tpu_custom_call.1} parent=71 // pred_check
          %p445 = pneg %p56
        $region74: #{tpu_custom_call.1} parent=71 // pred_check_branch
          %447 = sbr.rel (%p445) target = $region76
        $region75: #{tpu_custom_call.1} parent=71 // pred_region
          %p448 = scmp.lt.s32.totalorder %s31, 1
          %s449 = scalar_select %p448, %s31, 1
          %s450 = smul.addr %s449, 8
          %s451 = scalar_lea.vmem %s0, %s450
        $region76: #{tpu_custom_call.1} parent=71 // pred_fallthru
          _
      $region72: #{tpu_custom_call.1} parent=5 // pred_fallthru
        _
      %p452 = scmp.le.s32.totalorder 1, %s24
      %p453 = scmp.lt.s32.totalorder %s24, 3
      %p454 = pnand %p452, %p453
      %p455 = pneg %p454
      // Predicated region
      $region77: #{tpu_custom_call.1} parent=5 // pred_check
        _
      $region78: #{tpu_custom_call.1} parent=5 // pred_check_branch
        %457 = sbr.rel (%p454) target = $region80
      $region79: #{tpu_custom_call.1} parent=5 // pred_region
        %s458 = ssub.s32 %s24, 1
        %p459 = scmp.lt.s32.totalorder %s33, 1
        %s460 = scalar_select %p459, %s33, 1
        %s461 = smul.addr %s460, 8
        %s462 = scalar_lea.vmem %s0, %s461
        %p463 = pneg %p62
        %p464 = pneg %p59
        %p465 = pneg %p83
        %p466 = pneg %p80
        %p467 = pneg %p104
        %p468 = pneg %p101
        %p469 = pneg %p125
        %p470 = pneg %p122
        %p471 = pneg %p146
        %p472 = pneg %p143
        %p473 = pneg %p167
        %p474 = pneg %p164
        %p475 = pneg %p188
        %p476 = pneg %p185
        %p477 = pneg %p209
        %p478 = pneg %p206
        %p479 = pneg %p230
        %p480 = pneg %p227
        %p481 = pneg %p251
        %p482 = pneg %p248
        %p483 = pneg %p272
        %p484 = pneg %p269
        %p485 = pneg %p293
        %p486 = pneg %p290
        %p487 = pneg %p314
        %p488 = pneg %p311
        %p489 = pneg %p335
        %p490 = pneg %p332
        %p491 = pneg %p356
        %p492 = pneg %p353
        %p493 = pneg %p384
        %p494 = pneg %p381
        %s495 = sand.u32 %s371, 1
        %s496 = scalar_lea.sflag [#allocation3], %s495
        %s497 = sand.u32 %s371, 1
        %s498 = smul.addr %s497, 8
        %s499 = scalar_lea.vmem [#allocation2], %s498
        %p500 = scmp.lt.s32.totalorder %s33, 1
        %s501 = scalar_select %p500, %s33, 1
        %s502 = smul.addr %s501, 8
        %s503 = scalar_lea.vmem %s0, %s502
        %s505 = smul.u32 %s34, 8
        %v506 = vld [vmem:[%s503] sm:$0xff]
        %s507 = scalar_lea.vmem %s503, %s505
        %v508 = vld [vmem:[%s507] sm:$0xff]
        %v509 = vld [vmem:[%s7] sm:$0x1]
        %v510 = vld [vmem:[%s8] sm:$0x1]
        %vm511 = vcmask 261120
        %v512 = vsel %vm511, %v506, 0.0
        %513 = vadd.xlane.f32.xlu0 %v512
        %v514 = vpop.xlane.xlu0 %513
        %v515 = vrcp.pop 32.0
        %v516 = vmul.f32 %v514, %v515
        %v517 = vsub.f32 %v506, %v516
        %v518 = vmul.f32 %v517, %v517
        %v519 = vsel %vm511, %v518, 0.0
        %520 = vadd.xlane.f32.xlu0 %v519
        %v521 = vpop.xlane.xlu0 %520
        %v522 = vmul.f32 %v521, %v515
        %v523 = vadd.f32 %v522, 1e-05
        %v524 = vrsqrt.pop %v523
        %v525 = vmul.f32 %v517, %v524
        %v527 = vlaneseq
        %v528 = vshrl.u32 %v527, 7
        %v529 = vsub.s32 0, %v528
        %v530 = vrot.slane %v509, %v529
        %v532 = vmul.f32 %v525, %v530
        %v534 = vlaneseq
        %v535 = vshrl.u32 %v534, 7
        %v536 = vsub.s32 0, %v535
        %v537 = vrot.slane %v510, %v536
        %v539 = vadd.f32 %v532, %v537
        %v540 = vsel %vm511, %v508, 0.0
        %541 = vadd.xlane.f32.xlu0 %v540
        %v542 = vpop.xlane.xlu0 %541
        %v543 = vmul.f32 %v542, %v515
        %v544 = vsub.f32 %v508, %v543
        %v545 = vmul.f32 %v544, %v544
        %v546 = vsel %vm511, %v545, 0.0
        %547 = vadd.xlane.f32.xlu0 %v546
        %v548 = vpop.xlane.xlu0 %547
        %v549 = vmul.f32 %v548, %v515
        %v550 = vadd.f32 %v549, 1e-05
        %v551 = vrsqrt.pop %v550
        %v552 = vmul.f32 %v544, %v551
        %v553 = vmul.f32 %v552, %v530
        %v554 = vadd.f32 %v553, %v537
        %v555 = vpack.c.bf16 %v539, %v539
        %v556 = vld [vmem:[%s3] sm:$0xf]
        %v557 = vld [vmem:[%s3 + $0x4] sm:$0xf]
        %v558 = vld [vmem:[%s3 + $0x8] sm:$0xf]
        %v559 = vld [vmem:[%s3 + $0xc] sm:$0xf]
        %v560 = vld [vmem:[%s3 + $0x10] sm:$0xf]
        %v561 = vld [vmem:[%s3 + $0x14] sm:$0xf]
        %v562 = vld [vmem:[%s3 + $0x18] sm:$0xf]
        %v563 = vld [vmem:[%s3 + $0x1c] sm:$0xf]
        %v564 = vld [vmem:[%s3 + $0x20] sm:$0xf]
        %v565 = vld [vmem:[%s3 + $0x24] sm:$0xf]
        %v566 = vld [vmem:[%s3 + $0x28] sm:$0xf]
        %v567 = vld [vmem:[%s3 + $0x2c] sm:$0xf]
        %v568 = vld [vmem:[%s3 + $0x30] sm:$0xf]
        %v569 = vld [vmem:[%s3 + $0x34] sm:$0xf]
        %v570 = vld [vmem:[%s3 + $0x38] sm:$0xf]
        %v571 = vld [vmem:[%s3 + $0x3c] sm:$0xf]
        %v572 = vld [vmem:[%s3 + $0x40] sm:$0xf]
        %v573 = vld [vmem:[%s3 + $0x44] sm:$0xf]
        %v574 = vld [vmem:[%s3 + $0x48] sm:$0xf]
        %v575 = vld [vmem:[%s3 + $0x4c] sm:$0xf]
        %v576 = vld [vmem:[%s3 + $0x50] sm:$0xf]
        %v577 = vld [vmem:[%s3 + $0x54] sm:$0xf]
        %v578 = vld [vmem:[%s3 + $0x58] sm:$0xf]
        %v579 = vld [vmem:[%s3 + $0x5c] sm:$0xf]
        %v580 = vld [vmem:[%s3 + $0x60] sm:$0xf]
        %v581 = vld [vmem:[%s3 + $0x64] sm:$0xf]
        %v582 = vld [vmem:[%s3 + $0x68] sm:$0xf]
        %v583 = vld [vmem:[%s3 + $0x6c] sm:$0xf]
        %v584 = vld [vmem:[%s3 + $0x70] sm:$0xf]
        %v585 = vld [vmem:[%s3 + $0x74] sm:$0xf]
        %v586 = vld [vmem:[%s3 + $0x78] sm:$0xf]
        %v587 = vld [vmem:[%s3 + $0x7c] sm:$0xf]
        %v588 = vld [vmem:[%s4] sm:$0x1]
        %v589 = vld [vmem:[%s4 + $0x1] sm:$0x1]
        %v590 = vld [vmem:[%s4 + $0x2] sm:$0x1]
        %v591 = vld [vmem:[%s4 + $0x3] sm:$0x1]
        %v592 = vld [vmem:[%s4 + $0x4] sm:$0x1]
        %v593 = vld [vmem:[%s4 + $0x5] sm:$0x1]
        %v594 = vld [vmem:[%s4 + $0x6] sm:$0x1]
        %v595 = vld [vmem:[%s4 + $0x7] sm:$0x1]
        %v604 = vlaneseq
        %v605 = vshrl.u32 %v604, 7
        %v606 = vsub.s32 0, %v605
        %v607 = vrot.slane %v588, %v606
        %v608 = vlaneseq
        %v609 = vshrl.u32 %v608, 7
        %v610 = vsub.s32 0, %v609
        %v611 = vrot.slane %v589, %v610
        %v612 = vlaneseq
        %v613 = vshrl.u32 %v612, 7
        %v614 = vsub.s32 0, %v613
        %v615 = vrot.slane %v590, %v614
        %v616 = vlaneseq
        %v617 = vshrl.u32 %v616, 7
        %v618 = vsub.s32 0, %v617
        %v619 = vrot.slane %v591, %v618
        %v620 = vlaneseq
        %v621 = vshrl.u32 %v620, 7
        %v622 = vsub.s32 0, %v621
        %v623 = vrot.slane %v592, %v622
        %v624 = vlaneseq
        %v625 = vshrl.u32 %v624, 7
        %v626 = vsub.s32 0, %v625
        %v627 = vrot.slane %v593, %v626
        %v628 = vlaneseq
        %v629 = vshrl.u32 %v628, 7
        %v630 = vsub.s32 0, %v629
        %v631 = vrot.slane %v594, %v630
        %v632 = vlaneseq
        %v633 = vshrl.u32 %v632, 7
        %v634 = vsub.s32 0, %v633
        %v635 = vrot.slane %v595, %v634
        %v648 = vunpack.c.l.b16 %v556
        %v649 = vunpack.c.l.b16 %v557
        %v650 = vunpack.c.l.b16 %v558
        %v651 = vunpack.c.l.b16 %v559
        %v652 = vpack.c.b16 %v649, %v648
        %v653 = vpack.c.b16 %v651, %v650
        %v657 = vsel %vm511, %v555, 0
        %659 = vmatprep.subr.bf16.mxu0 0
        %660 = vmatpush1.bf16.msra.mxu0 0
        %661 = vmatprep.subr.bf16.mxu0 0
        %662 = vmatpush1.bf16.msra.mxu0 0
        %663 = vmatprep.subr.bf16.mxu0 0
        %664 = vmatpush1.bf16.msra.mxu0 0
        %665 = vmatprep.subr.bf16.mxu0 0
        %666 = vmatpush1.bf16.msra.mxu0 0
        %667 = vmatprep.subr.bf16.mxu0 0
        %668 = vmatpush1.bf16.msra.mxu0 0
        %669 = vmatprep.subr.bf16.mxu0 0
        %670 = vmatpush1.bf16.msra.mxu0 0
        %671 = vmatprep.subr.bf16.mxu0 0
        %672 = vmatpush1.bf16.msra.mxu0 %v653
        %673 = vmatprep.subr.bf16.mxu0 0
        %674 = vmatpush1.bf16.msra.mxu0 %v652
        %675 = vmatprep.subr.bf16.mxu0 0
        %676 = vmatpush2.bf16.msra.mxu0 0
        %677 = vmatprep.subr.bf16.mxu0 0
        %678 = vmatpush2.bf16.msra.mxu0 0
        %679 = vmatprep.subr.bf16.mxu0 0
        %680 = vmatpush2.bf16.msra.mxu0 0
        %681 = vmatprep.subr.bf16.mxu0 0
        %682 = vmatpush2.bf16.msra.mxu0 0
        %683 = vmatprep.subr.bf16.mxu0 0
        %684 = vmatpush2.bf16.msra.mxu0 0
        %685 = vmatprep.subr.bf16.mxu0 0
        %686 = vmatpush2.bf16.msra.mxu0 0
        %687 = vmatprep.subr.bf16.mxu0 0
        %688 = vmatpush2.bf16.msra.mxu0 0
        %689 = vmatprep.subr.bf16.mxu0 0
        %690 = vmatpush2.bf16.msra.mxu0 0
        %691 = vmatprep.mubr.bf16.mxu0 0
        %692 = vmatmul.mubr.bf16.gmra.mxu0 %v657
        %v693 = vpop.f32.mrf.mxu0
        %v694 = vadd.f32 %v607, %v693
        %v695 = vpop.f32.mrf.mxu0
        %v696 = vpop.f32.mrf.mxu0
        %v697 = vpop.f32.mrf.mxu0
        %698 = vdwg.mxu0
        %v703 = vunpack.c.l.b16 %v560
        %v704 = vunpack.c.l.b16 %v561
        %v705 = vunpack.c.l.b16 %v562
        %v706 = vunpack.c.l.b16 %v563
        %v707 = vpack.c.b16 %v704, %v703
        %v708 = vpack.c.b16 %v706, %v705
        %711 = vmatprep.subr.bf16.mxu0 0
        %712 = vmatpush1.bf16.msra.mxu0 0
        %713 = vmatprep.subr.bf16.mxu0 0
        %714 = vmatpush1.bf16.msra.mxu0 0
        %715 = vmatprep.subr.bf16.mxu0 0
        %716 = vmatpush1.bf16.msra.mxu0 0
        %717 = vmatprep.subr.bf16.mxu0 0
        %718 = vmatpush1.bf16.msra.mxu0 0
        %719 = vmatprep.subr.bf16.mxu0 0
        %720 = vmatpush1.bf16.msra.mxu0 0
        %721 = vmatprep.subr.bf16.mxu0 0
        %722 = vmatpush1.bf16.msra.mxu0 0
        %723 = vmatprep.subr.bf16.mxu0 0
        %724 = vmatpush1.bf16.msra.mxu0 %v708
        %725 = vmatprep.subr.bf16.mxu0 0
        %726 = vmatpush1.bf16.msra.mxu0 %v707
        %727 = vmatprep.subr.bf16.mxu0 0
        %728 = vmatpush2.bf16.msra.mxu0 0
        %729 = vmatprep.subr.bf16.mxu0 0
        %730 = vmatpush2.bf16.msra.mxu0 0
        %731 = vmatprep.subr.bf16.mxu0 0
        %732 = vmatpush2.bf16.msra.mxu0 0
        %733 = vmatprep.subr.bf16.mxu0 0
        %734 = vmatpush2.bf16.msra.mxu0 0
        %735 = vmatprep.subr.bf16.mxu0 0
        %736 = vmatpush2.bf16.msra.mxu0 0
        %737 = vmatprep.subr.bf16.mxu0 0
        %738 = vmatpush2.bf16.msra.mxu0 0
        %739 = vmatprep.subr.bf16.mxu0 0
        %740 = vmatpush2.bf16.msra.mxu0 0
        %741 = vmatprep.subr.bf16.mxu0 0
        %742 = vmatpush2.bf16.msra.mxu0 0
        %743 = vmatprep.mubr.bf16.mxu0 0
        %744 = vmatmul.mubr.bf16.gmra.mxu0 %v657
        %v745 = vpop.f32.mrf.mxu0
        %v746 = vadd.f32 %v611, %v745
        %v747 = vpop.f32.mrf.mxu0
        %v748 = vpop.f32.mrf.mxu0
        %v749 = vpop.f32.mrf.mxu0
        %750 = vdwg.mxu0
        %v755 = vunpack.c.l.b16 %v564
        %v756 = vunpack.c.l.b16 %v565
        %v757 = vunpack.c.l.b16 %v566
        %v758 = vunpack.c.l.b16 %v567
        %v759 = vpack.c.b16 %v756, %v755
        %v760 = vpack.c.b16 %v758, %v757
        %763 = vmatprep.subr.bf16.mxu0 0
        %764 = vmatpush1.bf16.msra.mxu0 0
        %765 = vmatprep.subr.bf16.mxu0 0
        %766 = vmatpush1.bf16.msra.mxu0 0
        %767 = vmatprep.subr.bf16.mxu0 0
        %768 = vmatpush1.bf16.msra.mxu0 0
        %769 = vmatprep.subr.bf16.mxu0 0
        %770 = vmatpush1.bf16.msra.mxu0 0
        %771 = vmatprep.subr.bf16.mxu0 0
        %772 = vmatpush1.bf16.msra.mxu0 0
        %773 = vmatprep.subr.bf16.mxu0 0
        %774 = vmatpush1.bf16.msra.mxu0 0
        %775 = vmatprep.subr.bf16.mxu0 0
        %776 = vmatpush1.bf16.msra.mxu0 %v760
        %777 = vmatprep.subr.bf16.mxu0 0
        %778 = vmatpush1.bf16.msra.mxu0 %v759
        %779 = vmatprep.subr.bf16.mxu0 0
        %780 = vmatpush2.bf16.msra.mxu0 0
        %781 = vmatprep.subr.bf16.mxu0 0
        %782 = vmatpush2.bf16.msra.mxu0 0
        %783 = vmatprep.subr.bf16.mxu0 0
        %784 = vmatpush2.bf16.msra.mxu0 0
        %785 = vmatprep.subr.bf16.mxu0 0
        %786 = vmatpush2.bf16.msra.mxu0 0
        %787 = vmatprep.subr.bf16.mxu0 0
        %788 = vmatpush2.bf16.msra.mxu0 0
        %789 = vmatprep.subr.bf16.mxu0 0
        %790 = vmatpush2.bf16.msra.mxu0 0
        %791 = vmatprep.subr.bf16.mxu0 0
        %792 = vmatpush2.bf16.msra.mxu0 0
        %793 = vmatprep.subr.bf16.mxu0 0
        %794 = vmatpush2.bf16.msra.mxu0 0
        %795 = vmatprep.mubr.bf16.mxu0 0
        %796 = vmatmul.mubr.bf16.gmra.mxu0 %v657
        %v797 = vpop.f32.mrf.mxu0
        %v798 = vadd.f32 %v615, %v797
        %v799 = vpop.f32.mrf.mxu0
        %v800 = vpop.f32.mrf.mxu0
        %v801 = vpop.f32.mrf.mxu0
        %802 = vdwg.mxu0
        %v807 = vunpack.c.l.b16 %v568
        %v808 = vunpack.c.l.b16 %v569
        %v809 = vunpack.c.l.b16 %v570
        %v810 = vunpack.c.l.b16 %v571
        %v811 = vpack.c.b16 %v808, %v807
        %v812 = vpack.c.b16 %v810, %v809
        %815 = vmatprep.subr.bf16.mxu0 0
        %816 = vmatpush1.bf16.msra.mxu0 0
        %817 = vmatprep.subr.bf16.mxu0 0
        %818 = vmatpush1.bf16.msra.mxu0 0
        %819 = vmatprep.subr.bf16.mxu0 0
        %820 = vmatpush1.bf16.msra.mxu0 0
        %821 = vmatprep.subr.bf16.mxu0 0
        %822 = vmatpush1.bf16.msra.mxu0 0
        %823 = vmatprep.subr.bf16.mxu0 0
        %824 = vmatpush1.bf16.msra.mxu0 0
        %825 = vmatprep.subr.bf16.mxu0 0
        %826 = vmatpush1.bf16.msra.mxu0 0
        %827 = vmatprep.subr.bf16.mxu0 0
        %828 = vmatpush1.bf16.msra.mxu0 %v812
        %829 = vmatprep.subr.bf16.mxu0 0
        %830 = vmatpush1.bf16.msra.mxu0 %v811
        %831 = vmatprep.subr.bf16.mxu0 0
        %832 = vmatpush2.bf16.msra.mxu0 0
        %833 = vmatprep.subr.bf16.mxu0 0
        %834 = vmatpush2.bf16.msra.mxu0 0
        %835 = vmatprep.subr.bf16.mxu0 0
        %836 = vmatpush2.bf16.msra.mxu0 0
        %837 = vmatprep.subr.bf16.mxu0 0
        %838 = vmatpush2.bf16.msra.mxu0 0
        %839 = vmatprep.subr.bf16.mxu0 0
        %840 = vmatpush2.bf16.msra.mxu0 0
        %841 = vmatprep.subr.bf16.mxu0 0
        %842 = vmatpush2.bf16.msra.mxu0 0
        %843 = vmatprep.subr.bf16.mxu0 0
        %844 = vmatpush2.bf16.msra.mxu0 0
        %845 = vmatprep.subr.bf16.mxu0 0
        %846 = vmatpush2.bf16.msra.mxu0 0
        %847 = vmatprep.mubr.bf16.mxu0 0
        %848 = vmatmul.mubr.bf16.gmra.mxu0 %v657
        %v849 = vpop.f32.mrf.mxu0
        %v850 = vadd.f32 %v619, %v849
        %v851 = vpop.f32.mrf.mxu0
        %v852 = vpop.f32.mrf.mxu0
        %v853 = vpop.f32.mrf.mxu0
        %854 = vdwg.mxu0
        %v859 = vunpack.c.l.b16 %v572
        %v860 = vunpack.c.l.b16 %v573
        %v861 = vunpack.c.l.b16 %v574
        %v862 = vunpack.c.l.b16 %v575
        %v863 = vpack.c.b16 %v860, %v859
        %v864 = vpack.c.b16 %v862, %v861
        %867 = vmatprep.subr.bf16.mxu0 0
        %868 = vmatpush1.bf16.msra.mxu0 0
        %869 = vmatprep.subr.bf16.mxu0 0
        %870 = vmatpush1.bf16.msra.mxu0 0
        %871 = vmatprep.subr.bf16.mxu0 0
        %872 = vmatpush1.bf16.msra.mxu0 0
        %873 = vmatprep.subr.bf16.mxu0 0
        %874 = vmatpush1.bf16.msra.mxu0 0
        %875 = vmatprep.subr.bf16.mxu0 0
        %876 = vmatpush1.bf16.msra.mxu0 0
        %877 = vmatprep.subr.bf16.mxu0 0
        %878 = vmatpush1.bf16.msra.mxu0 0
        %879 = vmatprep.subr.bf16.mxu0 0
        %880 = vmatpush1.bf16.msra.mxu0 %v864
        %881 = vmatprep.subr.bf16.mxu0 0
        %882 = vmatpush1.bf16.msra.mxu0 %v863
        %883 = vmatprep.subr.bf16.mxu0 0
        %884 = vmatpush2.bf16.msra.mxu0 0
        %885 = vmatprep.subr.bf16.mxu0 0
        %886 = vmatpush2.bf16.msra.mxu0 0
        %887 = vmatprep.subr.bf16.mxu0 0
        %888 = vmatpush2.bf16.msra.mxu0 0
        %889 = vmatprep.subr.bf16.mxu0 0
        %890 = vmatpush2.bf16.msra.mxu0 0
        %891 = vmatprep.subr.bf16.mxu0 0
        %892 = vmatpush2.bf16.msra.mxu0 0
        %893 = vmatprep.subr.bf16.mxu0 0
        %894 = vmatpush2.bf16.msra.mxu0 0
        %895 = vmatprep.subr.bf16.mxu0 0
        %896 = vmatpush2.bf16.msra.mxu0 0
        %897 = vmatprep.subr.bf16.mxu0 0
        %898 = vmatpush2.bf16.msra.mxu0 0
        %899 = vmatprep.mubr.bf16.mxu0 0
        %900 = vmatmul.mubr.bf16.gmra.mxu0 %v657
        %v901 = vpop.f32.mrf.mxu0
        %v902 = vadd.f32 %v623, %v901
        %v903 = vpop.f32.mrf.mxu0
        %v904 = vpop.f32.mrf.mxu0
        %v905 = vpop.f32.mrf.mxu0
        %906 = vdwg.mxu0
        %v911 = vunpack.c.l.b16 %v576
        %v912 = vunpack.c.l.b16 %v577
        %v913 = vunpack.c.l.b16 %v578
        %v914 = vunpack.c.l.b16 %v579
        %v915 = vpack.c.b16 %v912, %v911
        %v916 = vpack.c.b16 %v914, %v913
        %919 = vmatprep.subr.bf16.mxu0 0
        %920 = vmatpush1.bf16.msra.mxu0 0
        %921 = vmatprep.subr.bf16.mxu0 0
        %922 = vmatpush1.bf16.msra.mxu0 0
        %923 = vmatprep.subr.bf16.mxu0 0
        %924 = vmatpush1.bf16.msra.mxu0 0
        %925 = vmatprep.subr.bf16.mxu0 0
        %926 = vmatpush1.bf16.msra.mxu0 0
        %927 = vmatprep.subr.bf16.mxu0 0
        %928 = vmatpush1.bf16.msra.mxu0 0
        %929 = vmatprep.subr.bf16.mxu0 0
        %930 = vmatpush1.bf16.msra.mxu0 0
        %931 = vmatprep.subr.bf16.mxu0 0
        %932 = vmatpush1.bf16.msra.mxu0 %v916
        %933 = vmatprep.subr.bf16.mxu0 0
        %934 = vmatpush1.bf16.msra.mxu0 %v915
        %935 = vmatprep.subr.bf16.mxu0 0
        %936 = vmatpush2.bf16.msra.mxu0 0
        %937 = vmatprep.subr.bf16.mxu0 0
        %938 = vmatpush2.bf16.msra.mxu0 0
        %939 = vmatprep.subr.bf16.mxu0 0
        %940 = vmatpush2.bf16.msra.mxu0 0
        %941 = vmatprep.subr.bf16.mxu0 0
        %942 = vmatpush2.bf16.msra.mxu0 0
        %943 = vmatprep.subr.bf16.mxu0 0
        %944 = vmatpush2.bf16.msra.mxu0 0
        %945 = vmatprep.subr.bf16.mxu0 0
        %946 = vmatpush2.bf16.msra.mxu0 0
        %947 = vmatprep.subr.bf16.mxu0 0
        %948 = vmatpush2.bf16.msra.mxu0 0
        %949 = vmatprep.subr.bf16.mxu0 0
        %950 = vmatpush2.bf16.msra.mxu0 0
        %951 = vmatprep.mubr.bf16.mxu0 0
        %952 = vmatmul.mubr.bf16.gmra.mxu0 %v657
        %v953 = vpop.f32.mrf.mxu0
        %v954 = vadd.f32 %v627, %v953
        %v955 = vpop.f32.mrf.mxu0
        %v956 = vpop.f32.mrf.mxu0
        %v957 = vpop.f32.mrf.mxu0
        %958 = vdwg.mxu0
        %v963 = vunpack.c.l.b16 %v580
        %v964 = vunpack.c.l.b16 %v581
        %v965 = vunpack.c.l.b16 %v582
        %v966 = vunpack.c.l.b16 %v583
        %v967 = vpack.c.b16 %v964, %v963
        %v968 = vpack.c.b16 %v966, %v965
        %971 = vmatprep.subr.bf16.mxu0 0
        %972 = vmatpush1.bf16.msra.mxu0 0
        %973 = vmatprep.subr.bf16.mxu0 0
        %974 = vmatpush1.bf16.msra.mxu0 0
        %975 = vmatprep.subr.bf16.mxu0 0
        %976 = vmatpush1.bf16.msra.mxu0 0
        %977 = vmatprep.subr.bf16.mxu0 0
        %978 = vmatpush1.bf16.msra.mxu0 0
        %979 = vmatprep.subr.bf16.mxu0 0
        %980 = vmatpush1.bf16.msra.mxu0 0
        %981 = vmatprep.subr.bf16.mxu0 0
        %982 = vmatpush1.bf16.msra.mxu0 0
        %983 = vmatprep.subr.bf16.mxu0 0
        %984 = vmatpush1.bf16.msra.mxu0 %v968
        %985 = vmatprep.subr.bf16.mxu0 0
        %986 = vmatpush1.bf16.msra.mxu0 %v967
        %987 = vmatprep.subr.bf16.mxu0 0
        %988 = vmatpush2.bf16.msra.mxu0 0
        %989 = vmatprep.subr.bf16.mxu0 0
        %990 = vmatpush2.bf16.msra.mxu0 0
        %991 = vmatprep.subr.bf16.mxu0 0
        %992 = vmatpush2.bf16.msra.mxu0 0
        %993 = vmatprep.subr.bf16.mxu0 0
        %994 = vmatpush2.bf16.msra.mxu0 0
        %995 = vmatprep.subr.bf16.mxu0 0
        %996 = vmatpush2.bf16.msra.mxu0 0
        %997 = vmatprep.subr.bf16.mxu0 0
        %998 = vmatpush2.bf16.msra.mxu0 0
        %999 = vmatprep.subr.bf16.mxu0 0
        %1000 = vmatpush2.bf16.msra.mxu0 0
        %1001 = vmatprep.subr.bf16.mxu0 0
        %1002 = vmatpush2.bf16.msra.mxu0 0
        %1003 = vmatprep.mubr.bf16.mxu0 0
        %1004 = vmatmul.mubr.bf16.gmra.mxu0 %v657
        %v1005 = vpop.f32.mrf.mxu0
        %v1006 = vadd.f32 %v631, %v1005
        %v1007 = vpop.f32.mrf.mxu0
        %v1008 = vpop.f32.mrf.mxu0
        %v1009 = vpop.f32.mrf.mxu0
        %1010 = vdwg.mxu0
        %v1015 = vunpack.c.l.b16 %v584
        %v1016 = vunpack.c.l.b16 %v585
        %v1017 = vunpack.c.l.b16 %v586
        %v1018 = vunpack.c.l.b16 %v587
        %v1019 = vpack.c.b16 %v1016, %v1015
        %v1020 = vpack.c.b16 %v1018, %v1017
        %1023 = vmatprep.subr.bf16.mxu0 0
        %1024 = vmatpush1.bf16.msra.mxu0 0
        %1025 = vmatprep.subr.bf16.mxu0 0
        %1026 = vmatpush1.bf16.msra.mxu0 0
        %1027 = vmatprep.subr.bf16.mxu0 0
        %1028 = vmatpush1.bf16.msra.mxu0 0
        %1029 = vmatprep.subr.bf16.mxu0 0
        %1030 = vmatpush1.bf16.msra.mxu0 0
        %1031 = vmatprep.subr.bf16.mxu0 0
        %1032 = vmatpush1.bf16.msra.mxu0 0
        %1033 = vmatprep.subr.bf16.mxu0 0
        %1034 = vmatpush1.bf16.msra.mxu0 0
        %1035 = vmatprep.subr.bf16.mxu0 0
        %1036 = vmatpush1.bf16.msra.mxu0 %v1020
        %1037 = vmatprep.subr.bf16.mxu0 0
        %1038 = vmatpush1.bf16.msra.mxu0 %v1019
        %1039 = vmatprep.subr.bf16.mxu0 0
        %1040 = vmatpush2.bf16.msra.mxu0 0
        %1041 = vmatprep.subr.bf16.mxu0 0
        %1042 = vmatpush2.bf16.msra.mxu0 0
        %1043 = vmatprep.subr.bf16.mxu0 0
        %1044 = vmatpush2.bf16.msra.mxu0 0
        %1045 = vmatprep.subr.bf16.mxu0 0
        %1046 = vmatpush2.bf16.msra.mxu0 0
        %1047 = vmatprep.subr.bf16.mxu0 0
        %1048 = vmatpush2.bf16.msra.mxu0 0
        %1049 = vmatprep.subr.bf16.mxu0 0
        %1050 = vmatpush2.bf16.msra.mxu0 0
        %1051 = vmatprep.subr.bf16.mxu0 0
        %1052 = vmatpush2.bf16.msra.mxu0 0
        %1053 = vmatprep.subr.bf16.mxu0 0
        %1054 = vmatpush2.bf16.msra.mxu0 0
        %1055 = vmatprep.mubr.bf16.mxu0 0
        %1056 = vmatmul.mubr.bf16.gmra.mxu0 %v657
        %v1057 = vpop.f32.mrf.mxu0
        %v1058 = vadd.f32 %v635, %v1057
        %v1059 = vpop.f32.mrf.mxu0
        %v1060 = vpop.f32.mrf.mxu0
        %v1061 = vpop.f32.mrf.mxu0
        %1062 = vdwg.mxu0
        %v1063 = vpack.c.bf16 %v694, %v694
        %v1064 = vpack.c.bf16 %v746, %v746
        %v1065 = vpack.c.bf16 %v798, %v798
        %v1066 = vpack.c.bf16 %v850, %v850
        %v1067 = vpack.c.bf16 %v902, %v902
        %v1068 = vpack.c.bf16 %v954, %v954
        %v1069 = vpack.c.bf16 %v1006, %v1006
        %v1070 = vpack.c.bf16 %v1058, %v1058
        %v1071 = vpack.c.bf16 %v554, %v554
        %v1072 = vld [vmem:[%s1] sm:$0xf]
        %v1073 = vld [vmem:[%s1 + $0x4] sm:$0xf]
        %v1074 = vld [vmem:[%s1 + $0x8] sm:$0xf]
        %v1075 = vld [vmem:[%s1 + $0xc] sm:$0xf]
        %v1076 = vld [vmem:[%s1 + $0x10] sm:$0xf]
        %v1077 = vld [vmem:[%s1 + $0x14] sm:$0xf]
        %v1078 = vld [vmem:[%s1 + $0x18] sm:$0xf]
        %v1079 = vld [vmem:[%s1 + $0x1c] sm:$0xf]
        %v1080 = vld [vmem:[%s1 + $0x20] sm:$0xf]
        %v1081 = vld [vmem:[%s1 + $0x24] sm:$0xf]
        %v1082 = vld [vmem:[%s1 + $0x28] sm:$0xf]
        %v1083 = vld [vmem:[%s1 + $0x2c] sm:$0xf]
        %v1084 = vld [vmem:[%s1 + $0x30] sm:$0xf]
        %v1085 = vld [vmem:[%s1 + $0x34] sm:$0xf]
        %v1086 = vld [vmem:[%s1 + $0x38] sm:$0xf]
        %v1087 = vld [vmem:[%s1 + $0x3c] sm:$0xf]
        %v1088 = vld [vmem:[%s2] sm:$0x1]
        %v1089 = vld [vmem:[%s2 + $0x1] sm:$0x1]
        %v1090 = vld [vmem:[%s2 + $0x2] sm:$0x1]
        %v1091 = vld [vmem:[%s2 + $0x3] sm:$0x1]
        %v1096 = vlaneseq
        %v1097 = vshrl.u32 %v1096, 7
        %v1098 = vsub.s32 0, %v1097
        %v1099 = vrot.slane %v1088, %v1098
        %v1100 = vlaneseq
        %v1101 = vshrl.u32 %v1100, 7
        %v1102 = vsub.s32 0, %v1101
        %v1103 = vrot.slane %v1089, %v1102
        %v1104 = vlaneseq
        %v1105 = vshrl.u32 %v1104, 7
        %v1106 = vsub.s32 0, %v1105
        %v1107 = vrot.slane %v1090, %v1106
        %v1108 = vlaneseq
        %v1109 = vshrl.u32 %v1108, 7
        %v1110 = vsub.s32 0, %v1109
        %v1111 = vrot.slane %v1091, %v1110
        %v1120 = vunpack.c.l.b16 %v1072
        %v1121 = vunpack.c.l.b16 %v1073
        %v1122 = vunpack.c.l.b16 %v1074
        %v1123 = vunpack.c.l.b16 %v1075
        %v1124 = vpack.c.b16 %v1121, %v1120
        %v1125 = vpack.c.b16 %v1123, %v1122
        %v1129 = vsel %vm511, %v1071, 0
        %1131 = vmatprep.subr.bf16.mxu0 0
        %1132 = vmatpush1.bf16.msra.mxu0 0
        %1133 = vmatprep.subr.bf16.mxu0 0
        %1134 = vmatpush1.bf16.msra.mxu0 0
        %1135 = vmatprep.subr.bf16.mxu0 0
        %1136 = vmatpush1.bf16.msra.mxu0 0
        %1137 = vmatprep.subr.bf16.mxu0 0
        %1138 = vmatpush1.bf16.msra.mxu0 0
        %1139 = vmatprep.subr.bf16.mxu0 0
        %1140 = vmatpush1.bf16.msra.mxu0 0
        %1141 = vmatprep.subr.bf16.mxu0 0
        %1142 = vmatpush1.bf16.msra.mxu0 0
        %1143 = vmatprep.subr.bf16.mxu0 0
        %1144 = vmatpush1.bf16.msra.mxu0 %v1125
        %1145 = vmatprep.subr.bf16.mxu0 0
        %1146 = vmatpush1.bf16.msra.mxu0 %v1124
        %1147 = vmatprep.subr.bf16.mxu0 0
        %1148 = vmatpush2.bf16.msra.mxu0 0
        %1149 = vmatprep.subr.bf16.mxu0 0
        %1150 = vmatpush2.bf16.msra.mxu0 0
        %1151 = vmatprep.subr.bf16.mxu0 0
        %1152 = vmatpush2.bf16.msra.mxu0 0
        %1153 = vmatprep.subr.bf16.mxu0 0
        %1154 = vmatpush2.bf16.msra.mxu0 0
        %1155 = vmatprep.subr.bf16.mxu0 0
        %1156 = vmatpush2.bf16.msra.mxu0 0
        %1157 = vmatprep.subr.bf16.mxu0 0
        %1158 = vmatpush2.bf16.msra.mxu0 0
        %1159 = vmatprep.subr.bf16.mxu0 0
        %1160 = vmatpush2.bf16.msra.mxu0 0
        %1161 = vmatprep.subr.bf16.mxu0 0
        %1162 = vmatpush2.bf16.msra.mxu0 0
        %1163 = vmatprep.mubr.bf16.mxu0 0
        %1164 = vmatmul.mubr.bf16.gmra.mxu0 %v1129
        %v1165 = vpop.f32.mrf.mxu0
        %v1166 = vadd.f32 %v1099, %v1165
        %v1167 = vpop.f32.mrf.mxu0
        %v1168 = vpop.f32.mrf.mxu0
        %v1169 = vpop.f32.mrf.mxu0
        %1170 = vdwg.mxu0
        %v1175 = vunpack.c.l.b16 %v1076
        %v1176 = vunpack.c.l.b16 %v1077
        %v1177 = vunpack.c.l.b16 %v1078
        %v1178 = vunpack.c.l.b16 %v1079
        %v1179 = vpack.c.b16 %v1176, %v1175
        %v1180 = vpack.c.b16 %v1178, %v1177
        %1183 = vmatprep.subr.bf16.mxu0 0
        %1184 = vmatpush1.bf16.msra.mxu0 0
        %1185 = vmatprep.subr.bf16.mxu0 0
        %1186 = vmatpush1.bf16.msra.mxu0 0
        %1187 = vmatprep.subr.bf16.mxu0 0
        %1188 = vmatpush1.bf16.msra.mxu0 0
        %1189 = vmatprep.subr.bf16.mxu0 0
        %1190 = vmatpush1.bf16.msra.mxu0 0
        %1191 = vmatprep.subr.bf16.mxu0 0
        %1192 = vmatpush1.bf16.msra.mxu0 0
        %1193 = vmatprep.subr.bf16.mxu0 0
        %1194 = vmatpush1.bf16.msra.mxu0 0
        %1195 = vmatprep.subr.bf16.mxu0 0
        %1196 = vmatpush1.bf16.msra.mxu0 %v1180
        %1197 = vmatprep.subr.bf16.mxu0 0
        %1198 = vmatpush1.bf16.msra.mxu0 %v1179
        %1199 = vmatprep.subr.bf16.mxu0 0
        %1200 = vmatpush2.bf16.msra.mxu0 0
        %1201 = vmatprep.subr.bf16.mxu0 0
        %1202 = vmatpush2.bf16.msra.mxu0 0
        %1203 = vmatprep.subr.bf16.mxu0 0
        %1204 = vmatpush2.bf16.msra.mxu0 0
        %1205 = vmatprep.subr.bf16.mxu0 0
        %1206 = vmatpush2.bf16.msra.mxu0 0
        %1207 = vmatprep.subr.bf16.mxu0 0
        %1208 = vmatpush2.bf16.msra.mxu0 0
        %1209 = vmatprep.subr.bf16.mxu0 0
        %1210 = vmatpush2.bf16.msra.mxu0 0
        %1211 = vmatprep.subr.bf16.mxu0 0
        %1212 = vmatpush2.bf16.msra.mxu0 0
        %1213 = vmatprep.subr.bf16.mxu0 0
        %1214 = vmatpush2.bf16.msra.mxu0 0
        %1215 = vmatprep.mubr.bf16.mxu0 0
        %1216 = vmatmul.mubr.bf16.gmra.mxu0 %v1129
        %v1217 = vpop.f32.mrf.mxu0
        %v1218 = vadd.f32 %v1103, %v1217
        %v1219 = vpop.f32.mrf.mxu0
        %v1220 = vpop.f32.mrf.mxu0
        %v1221 = vpop.f32.mrf.mxu0
        %1222 = vdwg.mxu0
        %v1227 = vunpack.c.l.b16 %v1080
        %v1228 = vunpack.c.l.b16 %v1081
        %v1229 = vunpack.c.l.b16 %v1082
        %v1230 = vunpack.c.l.b16 %v1083
        %v1231 = vpack.c.b16 %v1228, %v1227
        %v1232 = vpack.c.b16 %v1230, %v1229
        %1235 = vmatprep.subr.bf16.mxu0 0
        %1236 = vmatpush1.bf16.msra.mxu0 0
        %1237 = vmatprep.subr.bf16.mxu0 0
        %1238 = vmatpush1.bf16.msra.mxu0 0
        %1239 = vmatprep.subr.bf16.mxu0 0
        %1240 = vmatpush1.bf16.msra.mxu0 0
        %1241 = vmatprep.subr.bf16.mxu0 0
        %1242 = vmatpush1.bf16.msra.mxu0 0
        %1243 = vmatprep.subr.bf16.mxu0 0
        %1244 = vmatpush1.bf16.msra.mxu0 0
        %1245 = vmatprep.subr.bf16.mxu0 0
        %1246 = vmatpush1.bf16.msra.mxu0 0
        %1247 = vmatprep.subr.bf16.mxu0 0
        %1248 = vmatpush1.bf16.msra.mxu0 %v1232
        %1249 = vmatprep.subr.bf16.mxu0 0
        %1250 = vmatpush1.bf16.msra.mxu0 %v1231
        %1251 = vmatprep.subr.bf16.mxu0 0
        %1252 = vmatpush2.bf16.msra.mxu0 0
        %1253 = vmatprep.subr.bf16.mxu0 0
        %1254 = vmatpush2.bf16.msra.mxu0 0
        %1255 = vmatprep.subr.bf16.mxu0 0
        %1256 = vmatpush2.bf16.msra.mxu0 0
        %1257 = vmatprep.subr.bf16.mxu0 0
        %1258 = vmatpush2.bf16.msra.mxu0 0
        %1259 = vmatprep.subr.bf16.mxu0 0
        %1260 = vmatpush2.bf16.msra.mxu0 0
        %1261 = vmatprep.subr.bf16.mxu0 0
        %1262 = vmatpush2.bf16.msra.mxu0 0
        %1263 = vmatprep.subr.bf16.mxu0 0
        %1264 = vmatpush2.bf16.msra.mxu0 0
        %1265 = vmatprep.subr.bf16.mxu0 0
        %1266 = vmatpush2.bf16.msra.mxu0 0
        %1267 = vmatprep.mubr.bf16.mxu0 0
        %1268 = vmatmul.mubr.bf16.gmra.mxu0 %v1129
        %v1269 = vpop.f32.mrf.mxu0
        %v1270 = vadd.f32 %v1107, %v1269
        %v1271 = vpop.f32.mrf.mxu0
        %v1272 = vpop.f32.mrf.mxu0
        %v1273 = vpop.f32.mrf.mxu0
        %1274 = vdwg.mxu0
        %v1279 = vunpack.c.l.b16 %v1084
        %v1280 = vunpack.c.l.b16 %v1085
        %v1281 = vunpack.c.l.b16 %v1086
        %v1282 = vunpack.c.l.b16 %v1087
        %v1283 = vpack.c.b16 %v1280, %v1279
        %v1284 = vpack.c.b16 %v1282, %v1281
        %1287 = vmatprep.subr.bf16.mxu0 0
        %1288 = vmatpush1.bf16.msra.mxu0 0
        %1289 = vmatprep.subr.bf16.mxu0 0
        %1290 = vmatpush1.bf16.msra.mxu0 0
        %1291 = vmatprep.subr.bf16.mxu0 0
        %1292 = vmatpush1.bf16.msra.mxu0 0
        %1293 = vmatprep.subr.bf16.mxu0 0
        %1294 = vmatpush1.bf16.msra.mxu0 0
        %1295 = vmatprep.subr.bf16.mxu0 0
        %1296 = vmatpush1.bf16.msra.mxu0 0
        %1297 = vmatprep.subr.bf16.mxu0 0
        %1298 = vmatpush1.bf16.msra.mxu0 0
        %1299 = vmatprep.subr.bf16.mxu0 0
        %1300 = vmatpush1.bf16.msra.mxu0 %v1284
        %1301 = vmatprep.subr.bf16.mxu0 0
        %1302 = vmatpush1.bf16.msra.mxu0 %v1283
        %1303 = vmatprep.subr.bf16.mxu0 0
        %1304 = vmatpush2.bf16.msra.mxu0 0
        %1305 = vmatprep.subr.bf16.mxu0 0
        %1306 = vmatpush2.bf16.msra.mxu0 0
        %1307 = vmatprep.subr.bf16.mxu0 0
        %1308 = vmatpush2.bf16.msra.mxu0 0
        %1309 = vmatprep.subr.bf16.mxu0 0
        %1310 = vmatpush2.bf16.msra.mxu0 0
        %1311 = vmatprep.subr.bf16.mxu0 0
        %1312 = vmatpush2.bf16.msra.mxu0 0
        %1313 = vmatprep.subr.bf16.mxu0 0
        %1314 = vmatpush2.bf16.msra.mxu0 0
        %1315 = vmatprep.subr.bf16.mxu0 0
        %1316 = vmatpush2.bf16.msra.mxu0 0
        %1317 = vmatprep.subr.bf16.mxu0 0
        %1318 = vmatpush2.bf16.msra.mxu0 0
        %1319 = vmatprep.mubr.bf16.mxu0 0
        %1320 = vmatmul.mubr.bf16.gmra.mxu0 %v1129
        %v1321 = vpop.f32.mrf.mxu0
        %v1322 = vadd.f32 %v1111, %v1321
        %v1323 = vpop.f32.mrf.mxu0
        %v1324 = vpop.f32.mrf.mxu0
        %v1325 = vpop.f32.mrf.mxu0
        %1326 = vdwg.mxu0
        %v1327 = vpack.c.bf16 %v1166, %v1166
        %v1328 = vpack.c.bf16 %v1218, %v1218
        %v1329 = vpack.c.bf16 %v1270, %v1270
        %v1330 = vpack.c.bf16 %v1322, %v1322
        %vm1331 = vcmask 64512
        %v1333 = vsel %vm1331, %v1327, 0
        %v1336 = vsel %vm1331, %v1063, 0
        %1338 = vmatprep.subr.bf16.mxu0 0
        %1339 = vmatpush1.bf16.xpose.msra.mxu0 0
        %1340 = vmatprep.subr.bf16.mxu0 0
        %1341 = vmatpush1.bf16.xpose.msra.mxu0 0
        %1342 = vmatprep.subr.bf16.mxu0 0
        %1343 = vmatpush1.bf16.xpose.msra.mxu0 0
        %1344 = vmatprep.subr.bf16.mxu0 0
        %1345 = vmatpush1.bf16.xpose.msra.mxu0 0
        %1346 = vmatprep.subr.bf16.mxu0 0
        %1347 = vmatpush1.bf16.xpose.msra.mxu0 0
        %1348 = vmatprep.subr.bf16.mxu0 0
        %1349 = vmatpush1.bf16.xpose.msra.mxu0 0
        %1350 = vmatprep.subr.bf16.mxu0 0
        %1351 = vmatpush1.bf16.xpose.msra.mxu0 0
        %1352 = vmatprep.subr.bf16.mxu0 0
        %1353 = vmatpush1.bf16.xpose.msra.mxu0 %v1336
        %1354 = vmatprep.subr.bf16.mxu0 0
        %1355 = vmatpush2.bf16.xpose.msra.mxu0 0
        %1356 = vmatprep.subr.bf16.mxu0 0
        %1357 = vmatpush2.bf16.xpose.msra.mxu0 0
        %1358 = vmatprep.subr.bf16.mxu0 0
        %1359 = vmatpush2.bf16.xpose.msra.mxu0 0
        %1360 = vmatprep.subr.bf16.mxu0 0
        %1361 = vmatpush2.bf16.xpose.msra.mxu0 0
        %1362 = vmatprep.subr.bf16.mxu0 0
        %1363 = vmatpush2.bf16.xpose.msra.mxu0 0
        %1364 = vmatprep.subr.bf16.mxu0 0
        %1365 = vmatpush2.bf16.xpose.msra.mxu0 0
        %1366 = vmatprep.subr.bf16.mxu0 0
        %1367 = vmatpush2.bf16.xpose.msra.mxu0 0
        %1368 = vmatprep.subr.bf16.mxu0 0
        %1369 = vmatpush2.bf16.xpose.msra.mxu0 0
        %1370 = vmatprep.mubr.bf16.mxu0 0
        %1371 = vmatmul.mubr.bf16.gmra.mxu0 %v1333
        %v1372 = vpop.f32.mrf.mxu0
        %v1373 = vadd.f32 0.0, %v1372
        %v1374 = vpop.f32.mrf.mxu0
        %v1375 = vpop.f32.mrf.mxu0
        %v1376 = vpop.f32.mrf.mxu0
        %1377 = vdwg.mxu0
        %v1379 = vsel %vm1331, %v1328, 0
        %v1382 = vsel %vm1331, %v1064, 0
        %1384 = vmatprep.subr.bf16.mxu0 0
        %1385 = vmatpush1.bf16.xpose.msra.mxu0 0
        %1386 = vmatprep.subr.bf16.mxu0 0
        %1387 = vmatpush1.bf16.xpose.msra.mxu0 0
        %1388 = vmatprep.subr.bf16.mxu0 0
        %1389 = vmatpush1.bf16.xpose.msra.mxu0 0
        %1390 = vmatprep.subr.bf16.mxu0 0
        %1391 = vmatpush1.bf16.xpose.msra.mxu0 0
        %1392 = vmatprep.subr.bf16.mxu0 0
        %1393 = vmatpush1.bf16.xpose.msra.mxu0 0
        %1394 = vmatprep.subr.bf16.mxu0 0
        %1395 = vmatpush1.bf16.xpose.msra.mxu0 0
        %1396 = vmatprep.subr.bf16.mxu0 0
        %1397 = vmatpush1.bf16.xpose.msra.mxu0 0
        %1398 = vmatprep.subr.bf16.mxu0 0
        %1399 = vmatpush1.bf16.xpose.msra.mxu0 %v1382
        %1400 = vmatprep.subr.bf16.mxu0 0
        %1401 = vmatpush2.bf16.xpose.msra.mxu0 0
        %1402 = vmatprep.subr.bf16.mxu0 0
        %1403 = vmatpush2.bf16.xpose.msra.mxu0 0
        %1404 = vmatprep.subr.bf16.mxu0 0
        %1405 = vmatpush2.bf16.xpose.msra.mxu0 0
        %1406 = vmatprep.subr.bf16.mxu0 0
        %1407 = vmatpush2.bf16.xpose.msra.mxu0 0
        %1408 = vmatprep.subr.bf16.mxu0 0
        %1409 = vmatpush2.bf16.xpose.msra.mxu0 0
        %1410 = vmatprep.subr.bf16.mxu0 0
        %1411 = vmatpush2.bf16.xpose.msra.mxu0 0
        %1412 = vmatprep.subr.bf16.mxu0 0
        %1413 = vmatpush2.bf16.xpose.msra.mxu0 0
        %1414 = vmatprep.subr.bf16.mxu0 0
        %1415 = vmatpush2.bf16.xpose.msra.mxu0 0
        %1416 = vmatprep.mubr.bf16.mxu0 0
        %1417 = vmatmul.mubr.bf16.gmra.mxu0 %v1379
        %v1418 = vpop.f32.mrf.mxu0
        %v1419 = vadd.f32 0.0, %v1418
        %v1420 = vpop.f32.mrf.mxu0
        %v1421 = vpop.f32.mrf.mxu0
        %v1422 = vpop.f32.mrf.mxu0
        %1423 = vdwg.mxu0
        %v1425 = vsel %vm1331, %v1329, 0
        %v1428 = vsel %vm1331, %v1065, 0
        %1430 = vmatprep.subr.bf16.mxu0 0
        %1431 = vmatpush1.bf16.xpose.msra.mxu0 0
        %1432 = vmatprep.subr.bf16.mxu0 0
        %1433 = vmatpush1.bf16.xpose.msra.mxu0 0
        %1434 = vmatprep.subr.bf16.mxu0 0
        %1435 = vmatpush1.bf16.xpose.msra.mxu0 0
        %1436 = vmatprep.subr.bf16.mxu0 0
        %1437 = vmatpush1.bf16.xpose.msra.mxu0 0
        %1438 = vmatprep.subr.bf16.mxu0 0
        %1439 = vmatpush1.bf16.xpose.msra.mxu0 0
        %1440 = vmatprep.subr.bf16.mxu0 0
        %1441 = vmatpush1.bf16.xpose.msra.mxu0 0
        %1442 = vmatprep.subr.bf16.mxu0 0
        %1443 = vmatpush1.bf16.xpose.msra.mxu0 0
        %1444 = vmatprep.subr.bf16.mxu0 0
        %1445 = vmatpush1.bf16.xpose.msra.mxu0 %v1428
        %1446 = vmatprep.subr.bf16.mxu0 0
        %1447 = vmatpush2.bf16.xpose.msra.mxu0 0
        %1448 = vmatprep.subr.bf16.mxu0 0
        %1449 = vmatpush2.bf16.xpose.msra.mxu0 0
        %1450 = vmatprep.subr.bf16.mxu0 0
        %1451 = vmatpush2.bf16.xpose.msra.mxu0 0
        %1452 = vmatprep.subr.bf16.mxu0 0
        %1453 = vmatpush2.bf16.xpose.msra.mxu0 0
        %1454 = vmatprep.subr.bf16.mxu0 0
        %1455 = vmatpush2.bf16.xpose.msra.mxu0 0
        %1456 = vmatprep.subr.bf16.mxu0 0
        %1457 = vmatpush2.bf16.xpose.msra.mxu0 0
        %1458 = vmatprep.subr.bf16.mxu0 0
        %1459 = vmatpush2.bf16.xpose.msra.mxu0 0
        %1460 = vmatprep.subr.bf16.mxu0 0
        %1461 = vmatpush2.bf16.xpose.msra.mxu0 0
        %1462 = vmatprep.mubr.bf16.mxu0 0
        %1463 = vmatmul.mubr.bf16.gmra.mxu0 %v1425
        %v1464 = vpop.f32.mrf.mxu0
        %v1465 = vadd.f32 0.0, %v1464
        %v1466 = vpop.f32.mrf.mxu0
        %v1467 = vpop.f32.mrf.mxu0
        %v1468 = vpop.f32.mrf.mxu0
        %1469 = vdwg.mxu0
        %v1471 = vsel %vm1331, %v1330, 0
        %v1474 = vsel %vm1331, %v1066, 0
        %1476 = vmatprep.subr.bf16.mxu0 0
        %1477 = vmatpush1.bf16.xpose.msra.mxu0 0
        %1478 = vmatprep.subr.bf16.mxu0 0
        %1479 = vmatpush1.bf16.xpose.msra.mxu0 0
        %1480 = vmatprep.subr.bf16.mxu0 0
        %1481 = vmatpush1.bf16.xpose.msra.mxu0 0
        %1482 = vmatprep.subr.bf16.mxu0 0
        %1483 = vmatpush1.bf16.xpose.msra.mxu0 0
        %1484 = vmatprep.subr.bf16.mxu0 0
        %1485 = vmatpush1.bf16.xpose.msra.mxu0 0
        %1486 = vmatprep.subr.bf16.mxu0 0
        %1487 = vmatpush1.bf16.xpose.msra.mxu0 0
        %1488 = vmatprep.subr.bf16.mxu0 0
        %1489 = vmatpush1.bf16.xpose.msra.mxu0 0
        %1490 = vmatprep.subr.bf16.mxu0 0
        %1491 = vmatpush1.bf16.xpose.msra.mxu0 %v1474
        %1492 = vmatprep.subr.bf16.mxu0 0
        %1493 = vmatpush2.bf16.xpose.msra.mxu0 0
        %1494 = vmatprep.subr.bf16.mxu0 0
        %1495 = vmatpush2.bf16.xpose.msra.mxu0 0
        %1496 = vmatprep.subr.bf16.mxu0 0
        %1497 = vmatpush2.bf16.xpose.msra.mxu0 0
        %1498 = vmatprep.subr.bf16.mxu0 0
        %1499 = vmatpush2.bf16.xpose.msra.mxu0 0
        %1500 = vmatprep.subr.bf16.mxu0 0
        %1501 = vmatpush2.bf16.xpose.msra.mxu0 0
        %1502 = vmatprep.subr.bf16.mxu0 0
        %1503 = vmatpush2.bf16.xpose.msra.mxu0 0
        %1504 = vmatprep.subr.bf16.mxu0 0
        %1505 = vmatpush2.bf16.xpose.msra.mxu0 0
        %1506 = vmatprep.subr.bf16.mxu0 0
        %1507 = vmatpush2.bf16.xpose.msra.mxu0 0
        %1508 = vmatprep.mubr.bf16.mxu0 0
        %1509 = vmatmul.mubr.bf16.gmra.mxu0 %v1471
        %v1510 = vpop.f32.mrf.mxu0
        %v1511 = vadd.f32 0.0, %v1510
        %v1512 = vpop.f32.mrf.mxu0
        %v1513 = vpop.f32.mrf.mxu0
        %v1514 = vpop.f32.mrf.mxu0
        %1515 = vdwg.mxu0
        %v1516 = vmul.f32 %v1373, 0.17677669
        %v1517 = vmul.f32 %v1419, 0.17677669
        %v1518 = vmul.f32 %v1465, 0.17677669
        %v1519 = vmul.f32 %v1511, 0.17677669
        %v1520 = vlaneseq
        %v1521 = vshrl.u32 %v1520, 7
        %v1522 = vstv %s505
        %v1523 = vadd.s32 %v1522, %v1521
        %v1524 = vlaneseq
        %v1525 = vand.u32 %v1524, 127
        %vm1526 = vcmp.le.s32.totalorder %v1525, %v1523
        %v1527 = vsel %vm1526, 1, 0
        %vm1528 = vcmp.eq.s32.totalorder %v1527, 1
        %v1529 = vsel %vm1528, %v1516, -1e+30
        %v1530 = vsel %vm1528, %v1517, -1e+30
        %v1531 = vsel %vm1528, %v1518, -1e+30
        %v1532 = vsel %vm1528, %v1519, -1e+30
        %v1533 = vsel %vm1331, %v1529, -inf
        %1534 = vmax.xlane.f32.xlu0 %v1533
        %v1535 = vpop.xlane.xlu0 %1534
        %v1536 = vsel %vm1331, %v1530, -inf
        %1537 = vmax.xlane.f32.xlu0 %v1536
        %v1538 = vpop.xlane.xlu0 %1537
        %v1539 = vsel %vm1331, %v1531, -inf
        %1540 = vmax.xlane.f32.xlu0 %v1539
        %v1541 = vpop.xlane.xlu0 %1540
        %v1542 = vsel %vm1331, %v1532, -inf
        %1543 = vmax.xlane.f32.xlu0 %v1542
        %v1544 = vpop.xlane.xlu0 %1543
        %v1545 = vsub.f32 %v1529, %v1535
        %v1546 = vsub.f32 %v1530, %v1538
        %v1547 = vsub.f32 %v1531, %v1541
        %v1548 = vsub.f32 %v1532, %v1544
        %v1549 = vmul.f32 %v1545, 1.442695
        %v1550 = vpow.pop %v1549
        %v1551 = vmul.f32 %v1546, 1.442695
        %v1552 = vpow.pop %v1551
        %v1553 = vmul.f32 %v1547, 1.442695
        %v1554 = vpow.pop %v1553
        %v1555 = vmul.f32 %v1548, 1.442695
        %v1556 = vpow.pop %v1555
        %v1557 = vsel %vm1331, %v1550, 0.0
        %1558 = vadd.xlane.f32.xlu0 %v1557
        %v1559 = vpop.xlane.xlu0 %1558
        %v1560 = vsel %vm1331, %v1552, 0.0
        %1561 = vadd.xlane.f32.xlu0 %v1560
        %v1562 = vpop.xlane.xlu0 %1561
        %v1563 = vsel %vm1331, %v1554, 0.0
        %1564 = vadd.xlane.f32.xlu0 %v1563
        %v1565 = vpop.xlane.xlu0 %1564
        %v1566 = vsel %vm1331, %v1556, 0.0
        %1567 = vadd.xlane.f32.xlu0 %v1566
        %v1568 = vpop.xlane.xlu0 %1567
        %v1569 = vrcp.pop %v1559
        %v1570 = vrcp.pop %v1562
        %v1571 = vrcp.pop %v1565
        %v1572 = vrcp.pop %v1568
        %v1573 = vmul.f32 %v1550, %v1569
        %v1574 = vmul.f32 %v1552, %v1570
        %v1575 = vmul.f32 %v1554, %v1571
        %v1576 = vmul.f32 %v1556, %v1572
        %v1577 = vpack.c.bf16 %v1573, %v1573
        %v1578 = vpack.c.bf16 %v1574, %v1574
        %v1579 = vpack.c.bf16 %v1575, %v1575
        %v1580 = vpack.c.bf16 %v1576, %v1576
        %v1582 = vsel %vm1331, %v1577, 0
        %vm1584 = vcmask 1043456
        %v1586 = vsel %vm1584, %v1067, 0
        %1588 = vmatprep.subr.bf16.mxu0 0
        %1589 = vmatpush1.bf16.msra.mxu0 0
        %1590 = vmatprep.subr.bf16.mxu0 0
        %1591 = vmatpush1.bf16.msra.mxu0 0
        %1592 = vmatprep.subr.bf16.mxu0 0
        %1593 = vmatpush1.bf16.msra.mxu0 0
        %1594 = vmatprep.subr.bf16.mxu0 0
        %1595 = vmatpush1.bf16.msra.mxu0 0
        %1596 = vmatprep.subr.bf16.mxu0 0
        %1597 = vmatpush1.bf16.msra.mxu0 0
        %1598 = vmatprep.subr.bf16.mxu0 0
        %1599 = vmatpush1.bf16.msra.mxu0 0
        %1600 = vmatprep.subr.bf16.mxu0 0
        %1601 = vmatpush1.bf16.msra.mxu0 0
        %1602 = vmatprep.subr.bf16.mxu0 0
        %1603 = vmatpush1.bf16.msra.mxu0 %v1586
        %1604 = vmatprep.subr.bf16.mxu0 0
        %1605 = vmatpush2.bf16.msra.mxu0 0
        %1606 = vmatprep.subr.bf16.mxu0 0
        %1607 = vmatpush2.bf16.msra.mxu0 0
        %1608 = vmatprep.subr.bf16.mxu0 0
        %1609 = vmatpush2.bf16.msra.mxu0 0
        %1610 = vmatprep.subr.bf16.mxu0 0
        %1611 = vmatpush2.bf16.msra.mxu0 0
        %1612 = vmatprep.subr.bf16.mxu0 0
        %1613 = vmatpush2.bf16.msra.mxu0 0
        %1614 = vmatprep.subr.bf16.mxu0 0
        %1615 = vmatpush2.bf16.msra.mxu0 0
        %1616 = vmatprep.subr.bf16.mxu0 0
        %1617 = vmatpush2.bf16.msra.mxu0 0
        %1618 = vmatprep.subr.bf16.mxu0 0
        %1619 = vmatpush2.bf16.msra.mxu0 0
        %1620 = vmatprep.mubr.bf16.mxu0 0
        %1621 = vmatmul.mubr.bf16.gmra.mxu0 %v1582
        %v1622 = vpop.f32.mrf.mxu0
        %v1623 = vadd.f32 0.0, %v1622
        %v1624 = vpop.f32.mrf.mxu0
        %v1625 = vpop.f32.mrf.mxu0
        %v1626 = vpop.f32.mrf.mxu0
        %1627 = vdwg.mxu0
        %v1629 = vsel %vm1331, %v1578, 0
        %v1632 = vsel %vm1584, %v1068, 0
        %1634 = vmatprep.subr.bf16.mxu0 0
        %1635 = vmatpush1.bf16.msra.mxu0 0
        %1636 = vmatprep.subr.bf16.mxu0 0
        %1637 = vmatpush1.bf16.msra.mxu0 0
        %1638 = vmatprep.subr.bf16.mxu0 0
        %1639 = vmatpush1.bf16.msra.mxu0 0
        %1640 = vmatprep.subr.bf16.mxu0 0
        %1641 = vmatpush1.bf16.msra.mxu0 0
        %1642 = vmatprep.subr.bf16.mxu0 0
        %1643 = vmatpush1.bf16.msra.mxu0 0
        %1644 = vmatprep.subr.bf16.mxu0 0
        %1645 = vmatpush1.bf16.msra.mxu0 0
        %1646 = vmatprep.subr.bf16.mxu0 0
        %1647 = vmatpush1.bf16.msra.mxu0 0
        %1648 = vmatprep.subr.bf16.mxu0 0
        %1649 = vmatpush1.bf16.msra.mxu0 %v1632
        %1650 = vmatprep.subr.bf16.mxu0 0
        %1651 = vmatpush2.bf16.msra.mxu0 0
        %1652 = vmatprep.subr.bf16.mxu0 0
        %1653 = vmatpush2.bf16.msra.mxu0 0
        %1654 = vmatprep.subr.bf16.mxu0 0
        %1655 = vmatpush2.bf16.msra.mxu0 0
        %1656 = vmatprep.subr.bf16.mxu0 0
        %1657 = vmatpush2.bf16.msra.mxu0 0
        %1658 = vmatprep.subr.bf16.mxu0 0
        %1659 = vmatpush2.bf16.msra.mxu0 0
        %1660 = vmatprep.subr.bf16.mxu0 0
        %1661 = vmatpush2.bf16.msra.mxu0 0
        %1662 = vmatprep.subr.bf16.mxu0 0
        %1663 = vmatpush2.bf16.msra.mxu0 0
        %1664 = vmatprep.subr.bf16.mxu0 0
        %1665 = vmatpush2.bf16.msra.mxu0 0
        %1666 = vmatprep.mubr.bf16.mxu0 0
        %1667 = vmatmul.mubr.bf16.gmra.mxu0 %v1629
        %v1668 = vpop.f32.mrf.mxu0
        %v1669 = vadd.f32 0.0, %v1668
        %v1670 = vpop.f32.mrf.mxu0
        %v1671 = vpop.f32.mrf.mxu0
        %v1672 = vpop.f32.mrf.mxu0
        %1673 = vdwg.mxu0
        %v1675 = vsel %vm1331, %v1579, 0
        %v1678 = vsel %vm1584, %v1069, 0
        %1680 = vmatprep.subr.bf16.mxu0 0
        %1681 = vmatpush1.bf16.msra.mxu0 0
        %1682 = vmatprep.subr.bf16.mxu0 0
        %1683 = vmatpush1.bf16.msra.mxu0 0
        %1684 = vmatprep.subr.bf16.mxu0 0
        %1685 = vmatpush1.bf16.msra.mxu0 0
        %1686 = vmatprep.subr.bf16.mxu0 0
        %1687 = vmatpush1.bf16.msra.mxu0 0
        %1688 = vmatprep.subr.bf16.mxu0 0
        %1689 = vmatpush1.bf16.msra.mxu0 0
        %1690 = vmatprep.subr.bf16.mxu0 0
        %1691 = vmatpush1.bf16.msra.mxu0 0
        %1692 = vmatprep.subr.bf16.mxu0 0
        %1693 = vmatpush1.bf16.msra.mxu0 0
        %1694 = vmatprep.subr.bf16.mxu0 0
        %1695 = vmatpush1.bf16.msra.mxu0 %v1678
        %1696 = vmatprep.subr.bf16.mxu0 0
        %1697 = vmatpush2.bf16.msra.mxu0 0
        %1698 = vmatprep.subr.bf16.mxu0 0
        %1699 = vmatpush2.bf16.msra.mxu0 0
        %1700 = vmatprep.subr.bf16.mxu0 0
        %1701 = vmatpush2.bf16.msra.mxu0 0
        %1702 = vmatprep.subr.bf16.mxu0 0
        %1703 = vmatpush2.bf16.msra.mxu0 0
        %1704 = vmatprep.subr.bf16.mxu0 0
        %1705 = vmatpush2.bf16.msra.mxu0 0
        %1706 = vmatprep.subr.bf16.mxu0 0
        %1707 = vmatpush2.bf16.msra.mxu0 0
        %1708 = vmatprep.subr.bf16.mxu0 0
        %1709 = vmatpush2.bf16.msra.mxu0 0
        %1710 = vmatprep.subr.bf16.mxu0 0
        %1711 = vmatpush2.bf16.msra.mxu0 0
        %1712 = vmatprep.mubr.bf16.mxu0 0
        %1713 = vmatmul.mubr.bf16.gmra.mxu0 %v1675
        %v1714 = vpop.f32.mrf.mxu0
        %v1715 = vadd.f32 0.0, %v1714
        %v1716 = vpop.f32.mrf.mxu0
        %v1717 = vpop.f32.mrf.mxu0
        %v1718 = vpop.f32.mrf.mxu0
        %1719 = vdwg.mxu0
        %v1721 = vsel %vm1331, %v1580, 0
        %v1724 = vsel %vm1584, %v1070, 0
        %1726 = vmatprep.subr.bf16.mxu0 0
        %1727 = vmatpush1.bf16.msra.mxu0 0
        %1728 = vmatprep.subr.bf16.mxu0 0
        %1729 = vmatpush1.bf16.msra.mxu0 0
        %1730 = vmatprep.subr.bf16.mxu0 0
        %1731 = vmatpush1.bf16.msra.mxu0 0
        %1732 = vmatprep.subr.bf16.mxu0 0
        %1733 = vmatpush1.bf16.msra.mxu0 0
        %1734 = vmatprep.subr.bf16.mxu0 0
        %1735 = vmatpush1.bf16.msra.mxu0 0
        %1736 = vmatprep.subr.bf16.mxu0 0
        %1737 = vmatpush1.bf16.msra.mxu0 0
        %1738 = vmatprep.subr.bf16.mxu0 0
        %1739 = vmatpush1.bf16.msra.mxu0 0
        %1740 = vmatprep.subr.bf16.mxu0 0
        %1741 = vmatpush1.bf16.msra.mxu0 %v1724
        %1742 = vmatprep.subr.bf16.mxu0 0
        %1743 = vmatpush2.bf16.msra.mxu0 0
        %1744 = vmatprep.subr.bf16.mxu0 0
        %1745 = vmatpush2.bf16.msra.mxu0 0
        %1746 = vmatprep.subr.bf16.mxu0 0
        %1747 = vmatpush2.bf16.msra.mxu0 0
        %1748 = vmatprep.subr.bf16.mxu0 0
        %1749 = vmatpush2.bf16.msra.mxu0 0
        %1750 = vmatprep.subr.bf16.mxu0 0
        %1751 = vmatpush2.bf16.msra.mxu0 0
        %1752 = vmatprep.subr.bf16.mxu0 0
        %1753 = vmatpush2.bf16.msra.mxu0 0
        %1754 = vmatprep.subr.bf16.mxu0 0
        %1755 = vmatpush2.bf16.msra.mxu0 0
        %1756 = vmatprep.subr.bf16.mxu0 0
        %1757 = vmatpush2.bf16.msra.mxu0 0
        %1758 = vmatprep.mubr.bf16.mxu0 0
        %1759 = vmatmul.mubr.bf16.gmra.mxu0 %v1721
        %v1760 = vpop.f32.mrf.mxu0
        %v1761 = vadd.f32 0.0, %v1760
        %v1762 = vpop.f32.mrf.mxu0
        %v1763 = vpop.f32.mrf.mxu0
        %v1764 = vpop.f32.mrf.mxu0
        %1765 = vdwg.mxu0
        %v1766 = vpack.c.bf16 %v1623, %v1623
        %v1767 = vpack.c.bf16 %v1669, %v1669
        %v1768 = vpack.c.bf16 %v1715, %v1715
        %v1769 = vpack.c.bf16 %v1761, %v1761
        %v1770 = vld [vmem:[%s5] sm:$0xf]
        %v1771 = vld [vmem:[%s5 + $0x4] sm:$0xf]
        %v1772 = vld [vmem:[%s5 + $0x8] sm:$0xf]
        %v1773 = vld [vmem:[%s5 + $0xc] sm:$0xf]
        %v1775 = vsel %vm1331, %v1766, 0
        %v1778 = vsel %vm1584, %v1770, 0
        %1780 = vmatprep.subr.bf16.mxu0 0
        %1781 = vmatpush1.bf16.msra.mxu0 0
        %1782 = vmatprep.subr.bf16.mxu0 0
        %1783 = vmatpush1.bf16.msra.mxu0 0
        %1784 = vmatprep.subr.bf16.mxu0 0
        %1785 = vmatpush1.bf16.msra.mxu0 0
        %1786 = vmatprep.subr.bf16.mxu0 0
        %1787 = vmatpush1.bf16.msra.mxu0 0
        %1788 = vmatprep.subr.bf16.mxu0 0
        %1789 = vmatpush1.bf16.msra.mxu0 0
        %1790 = vmatprep.subr.bf16.mxu0 0
        %1791 = vmatpush1.bf16.msra.mxu0 0
        %1792 = vmatprep.subr.bf16.mxu0 0
        %1793 = vmatpush1.bf16.msra.mxu0 0
        %1794 = vmatprep.subr.bf16.mxu0 0
        %1795 = vmatpush1.bf16.msra.mxu0 %v1778
        %1796 = vmatprep.subr.bf16.mxu0 0
        %1797 = vmatpush2.bf16.msra.mxu0 0
        %1798 = vmatprep.subr.bf16.mxu0 0
        %1799 = vmatpush2.bf16.msra.mxu0 0
        %1800 = vmatprep.subr.bf16.mxu0 0
        %1801 = vmatpush2.bf16.msra.mxu0 0
        %1802 = vmatprep.subr.bf16.mxu0 0
        %1803 = vmatpush2.bf16.msra.mxu0 0
        %1804 = vmatprep.subr.bf16.mxu0 0
        %1805 = vmatpush2.bf16.msra.mxu0 0
        %1806 = vmatprep.subr.bf16.mxu0 0
        %1807 = vmatpush2.bf16.msra.mxu0 0
        %1808 = vmatprep.subr.bf16.mxu0 0
        %1809 = vmatpush2.bf16.msra.mxu0 0
        %1810 = vmatprep.subr.bf16.mxu0 0
        %1811 = vmatpush2.bf16.msra.mxu0 0
        %1812 = vmatprep.mubr.bf16.mxu0 0
        %1813 = vmatmul.mubr.bf16.gmra.mxu0 %v1775
        %v1814 = vpop.f32.mrf.mxu0
        %v1815 = vadd.f32 0.0, %v1814
        %v1816 = vpop.f32.mrf.mxu0
        %v1817 = vpop.f32.mrf.mxu0
        %v1818 = vpop.f32.mrf.mxu0
        %1819 = vdwg.mxu0
        %v1821 = vsel %vm1331, %v1767, 0
        %v1824 = vsel %vm1584, %v1771, 0
        %1826 = vmatprep.subr.bf16.mxu0 0
        %1827 = vmatpush1.bf16.msra.mxu0 0
        %1828 = vmatprep.subr.bf16.mxu0 0
        %1829 = vmatpush1.bf16.msra.mxu0 0
        %1830 = vmatprep.subr.bf16.mxu0 0
        %1831 = vmatpush1.bf16.msra.mxu0 0
        %1832 = vmatprep.subr.bf16.mxu0 0
        %1833 = vmatpush1.bf16.msra.mxu0 0
        %1834 = vmatprep.subr.bf16.mxu0 0
        %1835 = vmatpush1.bf16.msra.mxu0 0
        %1836 = vmatprep.subr.bf16.mxu0 0
        %1837 = vmatpush1.bf16.msra.mxu0 0
        %1838 = vmatprep.subr.bf16.mxu0 0
        %1839 = vmatpush1.bf16.msra.mxu0 0
        %1840 = vmatprep.subr.bf16.mxu0 0
        %1841 = vmatpush1.bf16.msra.mxu0 %v1824
        %1842 = vmatprep.subr.bf16.mxu0 0
        %1843 = vmatpush2.bf16.msra.mxu0 0
        %1844 = vmatprep.subr.bf16.mxu0 0
        %1845 = vmatpush2.bf16.msra.mxu0 0
        %1846 = vmatprep.subr.bf16.mxu0 0
        %1847 = vmatpush2.bf16.msra.mxu0 0
        %1848 = vmatprep.subr.bf16.mxu0 0
        %1849 = vmatpush2.bf16.msra.mxu0 0
        %1850 = vmatprep.subr.bf16.mxu0 0
        %1851 = vmatpush2.bf16.msra.mxu0 0
        %1852 = vmatprep.subr.bf16.mxu0 0
        %1853 = vmatpush2.bf16.msra.mxu0 0
        %1854 = vmatprep.subr.bf16.mxu0 0
        %1855 = vmatpush2.bf16.msra.mxu0 0
        %1856 = vmatprep.subr.bf16.mxu0 0
        %1857 = vmatpush2.bf16.msra.mxu0 0
        %1858 = vmatprep.mubr.bf16.mxu0 0
        %1859 = vmatmul.mubr.bf16.gmra.mxu0 %v1821
        %v1860 = vpop.f32.mrf.mxu0
        %v1861 = vadd.f32 0.0, %v1860
        %v1862 = vpop.f32.mrf.mxu0
        %v1863 = vpop.f32.mrf.mxu0
        %v1864 = vpop.f32.mrf.mxu0
        %1865 = vdwg.mxu0
        %v1867 = vsel %vm1331, %v1768, 0
        %v1870 = vsel %vm1584, %v1772, 0
        %1872 = vmatprep.subr.bf16.mxu0 0
        %1873 = vmatpush1.bf16.msra.mxu0 0
        %1874 = vmatprep.subr.bf16.mxu0 0
        %1875 = vmatpush1.bf16.msra.mxu0 0
        %1876 = vmatprep.subr.bf16.mxu0 0
        %1877 = vmatpush1.bf16.msra.mxu0 0
        %1878 = vmatprep.subr.bf16.mxu0 0
        %1879 = vmatpush1.bf16.msra.mxu0 0
        %1880 = vmatprep.subr.bf16.mxu0 0
        %1881 = vmatpush1.bf16.msra.mxu0 0
        %1882 = vmatprep.subr.bf16.mxu0 0
        %1883 = vmatpush1.bf16.msra.mxu0 0
        %1884 = vmatprep.subr.bf16.mxu0 0
        %1885 = vmatpush1.bf16.msra.mxu0 0
        %1886 = vmatprep.subr.bf16.mxu0 0
        %1887 = vmatpush1.bf16.msra.mxu0 %v1870
        %1888 = vmatprep.subr.bf16.mxu0 0
        %1889 = vmatpush2.bf16.msra.mxu0 0
        %1890 = vmatprep.subr.bf16.mxu0 0
        %1891 = vmatpush2.bf16.msra.mxu0 0
        %1892 = vmatprep.subr.bf16.mxu0 0
        %1893 = vmatpush2.bf16.msra.mxu0 0
        %1894 = vmatprep.subr.bf16.mxu0 0
        %1895 = vmatpush2.bf16.msra.mxu0 0
        %1896 = vmatprep.subr.bf16.mxu0 0
        %1897 = vmatpush2.bf16.msra.mxu0 0
        %1898 = vmatprep.subr.bf16.mxu0 0
        %1899 = vmatpush2.bf16.msra.mxu0 0
        %1900 = vmatprep.subr.bf16.mxu0 0
        %1901 = vmatpush2.bf16.msra.mxu0 0
        %1902 = vmatprep.subr.bf16.mxu0 0
        %1903 = vmatpush2.bf16.msra.mxu0 0
        %1904 = vmatprep.mubr.bf16.mxu0 0
        %1905 = vmatmul.mubr.bf16.gmra.mxu0 %v1867
        %v1906 = vpop.f32.mrf.mxu0
        %v1907 = vadd.f32 0.0, %v1906
        %v1908 = vpop.f32.mrf.mxu0
        %v1909 = vpop.f32.mrf.mxu0
        %v1910 = vpop.f32.mrf.mxu0
        %1911 = vdwg.mxu0
        %v1913 = vsel %vm1331, %v1769, 0
        %v1916 = vsel %vm1584, %v1773, 0
        %1918 = vmatprep.subr.bf16.mxu0 0
        %1919 = vmatpush1.bf16.msra.mxu0 0
        %1920 = vmatprep.subr.bf16.mxu0 0
        %1921 = vmatpush1.bf16.msra.mxu0 0
        %1922 = vmatprep.subr.bf16.mxu0 0
        %1923 = vmatpush1.bf16.msra.mxu0 0
        %1924 = vmatprep.subr.bf16.mxu0 0
        %1925 = vmatpush1.bf16.msra.mxu0 0
        %1926 = vmatprep.subr.bf16.mxu0 0
        %1927 = vmatpush1.bf16.msra.mxu0 0
        %1928 = vmatprep.subr.bf16.mxu0 0
        %1929 = vmatpush1.bf16.msra.mxu0 0
        %1930 = vmatprep.subr.bf16.mxu0 0
        %1931 = vmatpush1.bf16.msra.mxu0 0
        %1932 = vmatprep.subr.bf16.mxu0 0
        %1933 = vmatpush1.bf16.msra.mxu0 %v1916
        %1934 = vmatprep.subr.bf16.mxu0 0
        %1935 = vmatpush2.bf16.msra.mxu0 0
        %1936 = vmatprep.subr.bf16.mxu0 0
        %1937 = vmatpush2.bf16.msra.mxu0 0
        %1938 = vmatprep.subr.bf16.mxu0 0
        %1939 = vmatpush2.bf16.msra.mxu0 0
        %1940 = vmatprep.subr.bf16.mxu0 0
        %1941 = vmatpush2.bf16.msra.mxu0 0
        %1942 = vmatprep.subr.bf16.mxu0 0
        %1943 = vmatpush2.bf16.msra.mxu0 0
        %1944 = vmatprep.subr.bf16.mxu0 0
        %1945 = vmatpush2.bf16.msra.mxu0 0
        %1946 = vmatprep.subr.bf16.mxu0 0
        %1947 = vmatpush2.bf16.msra.mxu0 0
        %1948 = vmatprep.subr.bf16.mxu0 0
        %1949 = vmatpush2.bf16.msra.mxu0 0
        %1950 = vmatprep.mubr.bf16.mxu0 0
        %1951 = vmatmul.mubr.bf16.gmra.mxu0 %v1913
        %v1952 = vpop.f32.mrf.mxu0
        %v1953 = vadd.f32 0.0, %v1952
        %v1954 = vpop.f32.mrf.mxu0
        %v1955 = vpop.f32.mrf.mxu0
        %v1956 = vpop.f32.mrf.mxu0
        %1957 = vdwg.mxu0
        %v1958 = vsel %vm511, %v1815, 0.0
        %v1959 = vsel %vm511, %v1861, 0.0
        %v1960 = vadd.f32 %v1958, %v1959
        %v1961 = vsel %vm511, %v1907, 0.0
        %v1962 = vadd.f32 %v1960, %v1961
        %v1963 = vsel %vm511, %v1953, 0.0
        %v1964 = vadd.f32 %v1962, %v1963
        %v1965 = vld [vmem:[%s6] sm:$0x1]
        %v1967 = vlaneseq
        %v1968 = vshrl.u32 %v1967, 7
        %v1969 = vsub.s32 0, %v1968
        %v1970 = vrot.slane %v1965, %v1969
        %v1972 = vadd.f32 %v1964, %v1970
        %v1973 = vadd.f32 %v508, %v1972
        %v1974 = vld [vmem:[%s9] sm:$0x1]
        %v1975 = vld [vmem:[%s10] sm:$0x1]
        %v1976 = vsel %vm511, %v1973, 0.0
        %1977 = vadd.xlane.f32.xlu0 %v1976
        %v1978 = vpop.xlane.xlu0 %1977
        %v1979 = vmul.f32 %v1978, %v515
        %v1980 = vsub.f32 %v1973, %v1979
        %v1981 = vmul.f32 %v1980, %v1980
        %v1982 = vsel %vm511, %v1981, 0.0
        %1983 = vadd.xlane.f32.xlu0 %v1982
        %v1984 = vpop.xlane.xlu0 %1983
        %v1985 = vmul.f32 %v1984, %v515
        %v1986 = vadd.f32 %v1985, 1e-05
        %v1987 = vrsqrt.pop %v1986
        %v1988 = vmul.f32 %v1980, %v1987
        %v1990 = vlaneseq
        %v1991 = vshrl.u32 %v1990, 7
        %v1992 = vsub.s32 0, %v1991
        %v1993 = vrot.slane %v1974, %v1992
        %v1995 = vmul.f32 %v1988, %v1993
        %v1997 = vlaneseq
        %v1998 = vshrl.u32 %v1997, 7
        %v1999 = vsub.s32 0, %v1998
        %v2000 = vrot.slane %v1975, %v1999
        %v2002 = vadd.f32 %v1995, %v2000
        %v2003 = vpack.c.bf16 %v2002, %v2002
        %v2004 = vld [vmem:[%s11] sm:$0xf]
        %v2005 = vld [vmem:[%s11 + $0x4] sm:$0xf]
        %v2006 = vld [vmem:[%s11 + $0x8] sm:$0xf]
        %v2007 = vld [vmem:[%s11 + $0xc] sm:$0xf]
        %v2008 = vld [vmem:[%s12] sm:$0x1]
        %v2010 = vlaneseq
        %v2011 = vshrl.u32 %v2010, 7
        %v2012 = vsub.s32 0, %v2011
        %v2013 = vrot.slane %v2008, %v2012
        %v2019 = vunpack.c.l.b16 %v2004
        %v2020 = vunpack.c.l.b16 %v2005
        %v2021 = vunpack.c.l.b16 %v2006
        %v2022 = vunpack.c.l.b16 %v2007
        %v2023 = vpack.c.b16 %v2020, %v2019
        %v2024 = vpack.c.b16 %v2022, %v2021
        %v2028 = vsel %vm511, %v2003, 0
        %2030 = vmatprep.subr.bf16.mxu0 0
        %2031 = vmatpush1.bf16.msra.mxu0 0
        %2032 = vmatprep.subr.bf16.mxu0 0
        %2033 = vmatpush1.bf16.msra.mxu0 0
        %2034 = vmatprep.subr.bf16.mxu0 0
        %2035 = vmatpush1.bf16.msra.mxu0 0
        %2036 = vmatprep.subr.bf16.mxu0 0
        %2037 = vmatpush1.bf16.msra.mxu0 0
        %2038 = vmatprep.subr.bf16.mxu0 0
        %2039 = vmatpush1.bf16.msra.mxu0 0
        %2040 = vmatprep.subr.bf16.mxu0 0
        %2041 = vmatpush1.bf16.msra.mxu0 0
        %2042 = vmatprep.subr.bf16.mxu0 0
        %2043 = vmatpush1.bf16.msra.mxu0 %v2024
        %2044 = vmatprep.subr.bf16.mxu0 0
        %2045 = vmatpush1.bf16.msra.mxu0 %v2023
        %2046 = vmatprep.subr.bf16.mxu0 0
        %2047 = vmatpush2.bf16.msra.mxu0 0
        %2048 = vmatprep.subr.bf16.mxu0 0
        %2049 = vmatpush2.bf16.msra.mxu0 0
        %2050 = vmatprep.subr.bf16.mxu0 0
        %2051 = vmatpush2.bf16.msra.mxu0 0
        %2052 = vmatprep.subr.bf16.mxu0 0
        %2053 = vmatpush2.bf16.msra.mxu0 0
        %2054 = vmatprep.subr.bf16.mxu0 0
        %2055 = vmatpush2.bf16.msra.mxu0 0
        %2056 = vmatprep.subr.bf16.mxu0 0
        %2057 = vmatpush2.bf16.msra.mxu0 0
        %2058 = vmatprep.subr.bf16.mxu0 0
        %2059 = vmatpush2.bf16.msra.mxu0 0
        %2060 = vmatprep.subr.bf16.mxu0 0
        %2061 = vmatpush2.bf16.msra.mxu0 0
        %2062 = vmatprep.mubr.bf16.mxu0 0
        %2063 = vmatmul.mubr.bf16.gmra.mxu0 %v2028
        %v2064 = vpop.f32.mrf.mxu0
        %v2065 = vadd.f32 %v2013, %v2064
        %v2066 = vpop.f32.mrf.mxu0
        %v2067 = vpop.f32.mrf.mxu0
        %v2068 = vpop.f32.mrf.mxu0
        %2069 = vdwg.mxu0
        %v2070 = vmul.f32 %v2065, %v2065
        %v2071 = vmul.f32 %v2065, 0.5
        %v2072 = vmul.f32 %v2065, 0.66285247
        %v2073 = vmul.f32 %v2070, 0.044715
        %v2074 = vadd.f32 %v2073, 1.0
        %v2075 = vmul.f32 %v2072, %v2074
        %v2076 = vadd.f32 %v2075, 1.0
        %v2077 = vmul.f32 %v2071, %v2076
        %v2078 = vpack.c.bf16 %v2077, %v2077
        %v2079 = vld [vmem:[%s13] sm:$0xf]
        %v2080 = vld [vmem:[%s13 + $0x4] sm:$0xf]
        %v2081 = vld [vmem:[%s13 + $0x8] sm:$0xf]
        %v2082 = vld [vmem:[%s13 + $0xc] sm:$0xf]
        %v2083 = vld [vmem:[%s13 + $0x10] sm:$0xf]
        %v2084 = vld [vmem:[%s13 + $0x14] sm:$0xf]
        %v2085 = vld [vmem:[%s13 + $0x18] sm:$0xf]
        %v2086 = vld [vmem:[%s13 + $0x1c] sm:$0xf]
        %v2087 = vld [vmem:[%s13 + $0x20] sm:$0xf]
        %v2088 = vld [vmem:[%s13 + $0x24] sm:$0xf]
        %v2089 = vld [vmem:[%s13 + $0x28] sm:$0xf]
        %v2090 = vld [vmem:[%s13 + $0x2c] sm:$0xf]
        %v2091 = vld [vmem:[%s13 + $0x30] sm:$0xf]
        %v2092 = vld [vmem:[%s13 + $0x34] sm:$0xf]
        %v2093 = vld [vmem:[%s13 + $0x38] sm:$0xf]
        %v2094 = vld [vmem:[%s13 + $0x3c] sm:$0xf]
        %v2095 = vld [vmem:[%s14] sm:$0x1]
        %v2097 = vlaneseq
        %v2098 = vshrl.u32 %v2097, 7
        %v2099 = vsub.s32 0, %v2098
        %v2100 = vrot.slane %v2095, %v2099
        %v2118 = vunpack.c.l.b16 %v2079
        %v2119 = vunpack.c.l.b16 %v2080
        %v2120 = vunpack.c.l.b16 %v2081
        %v2121 = vunpack.c.l.b16 %v2082
        %v2122 = vunpack.c.l.b16 %v2083
        %v2123 = vunpack.c.l.b16 %v2084
        %v2124 = vunpack.c.l.b16 %v2085
        %v2125 = vunpack.c.l.b16 %v2086
        %v2126 = vunpack.c.l.b16 %v2087
        %v2127 = vunpack.c.l.b16 %v2088
        %v2128 = vunpack.c.l.b16 %v2089
        %v2129 = vunpack.c.l.b16 %v2090
        %v2130 = vunpack.c.l.b16 %v2091
        %v2131 = vunpack.c.l.b16 %v2092
        %v2132 = vunpack.c.l.b16 %v2093
        %v2133 = vunpack.c.l.b16 %v2094
        %v2134 = vpack.c.b16 %v2119, %v2118
        %v2135 = vpack.c.b16 %v2121, %v2120
        %v2136 = vpack.c.b16 %v2123, %v2122
        %v2137 = vpack.c.b16 %v2125, %v2124
        %v2138 = vpack.c.b16 %v2127, %v2126
        %v2139 = vpack.c.b16 %v2129, %v2128
        %v2140 = vpack.c.b16 %v2131, %v2130
        %v2141 = vpack.c.b16 %v2133, %v2132
        %2150 = vmatprep.subr.bf16.mxu0 0
        %2151 = vmatpush1.bf16.msra.mxu0 %v2141
        %2152 = vmatprep.subr.bf16.mxu0 0
        %2153 = vmatpush1.bf16.msra.mxu0 %v2140
        %2154 = vmatprep.subr.bf16.mxu0 0
        %2155 = vmatpush1.bf16.msra.mxu0 %v2139
        %2156 = vmatprep.subr.bf16.mxu0 0
        %2157 = vmatpush1.bf16.msra.mxu0 %v2138
        %2158 = vmatprep.subr.bf16.mxu0 0
        %2159 = vmatpush1.bf16.msra.mxu0 %v2137
        %2160 = vmatprep.subr.bf16.mxu0 0
        %2161 = vmatpush1.bf16.msra.mxu0 %v2136
        %2162 = vmatprep.subr.bf16.mxu0 0
        %2163 = vmatpush1.bf16.msra.mxu0 %v2135
        %2164 = vmatprep.subr.bf16.mxu0 0
        %2165 = vmatpush1.bf16.msra.mxu0 %v2134
        %2166 = vmatprep.subr.bf16.mxu0 0
        %2167 = vmatpush2.bf16.msra.mxu0 0
        %2168 = vmatprep.subr.bf16.mxu0 0
        %2169 = vmatpush2.bf16.msra.mxu0 0
        %2170 = vmatprep.subr.bf16.mxu0 0
        %2171 = vmatpush2.bf16.msra.mxu0 0
        %2172 = vmatprep.subr.bf16.mxu0 0
        %2173 = vmatpush2.bf16.msra.mxu0 0
        %2174 = vmatprep.subr.bf16.mxu0 0
        %2175 = vmatpush2.bf16.msra.mxu0 0
        %2176 = vmatprep.subr.bf16.mxu0 0
        %2177 = vmatpush2.bf16.msra.mxu0 0
        %2178 = vmatprep.subr.bf16.mxu0 0
        %2179 = vmatpush2.bf16.msra.mxu0 0
        %2180 = vmatprep.subr.bf16.mxu0 0
        %2181 = vmatpush2.bf16.msra.mxu0 0
        %2182 = vmatprep.mubr.bf16.mxu0 0
        %2183 = vmatmul.mubr.bf16.gmra.mxu0 %v2078
        %v2184 = vpop.f32.mrf.mxu0
        %v2185 = vadd.f32 %v2100, %v2184
        %v2186 = vpop.f32.mrf.mxu0
        %v2187 = vpop.f32.mrf.mxu0
        %v2188 = vpop.f32.mrf.mxu0
        %2189 = vdwg.mxu0
        %v2190 = vadd.f32 %v2002, %v2185
        %2191 = vst.msk [vmem:[%s499] sm:$0xff] %vm511, %v2190
        %s2192 = sand.u32 %s371, 1
        %s2193 = scalar_lea.sflag [#allocation3], %s2192
        %s2194 = sand.u32 %s371, 1
        %s2195 = smul.addr %s2194, 8
        %s2196 = scalar_lea.vmem [#allocation2], %s2195
        // Predicated region
        $region81: #{tpu_custom_call.1} parent=79 // pred_check
          %p2197 = pneg %p381
        $region82: #{tpu_custom_call.1} parent=79 // pred_check_branch
          %2199 = sbr.rel (%p2197) target = $region84
        $region83: #{tpu_custom_call.1} parent=79 // pred_region
          %s2201 = ssub.s32 128, 128
          %2202 = vsyncadd %s2193, %s2201
          %s2203 = sadd.s32 %s34, %s33
          %s2204 = smul.addr %s2203, 128
          %s2205 = scalar_lea.hbm %s15, %s2204
          %s2207 = sshll.u32 %s2196, 4
          %s2208 = int_to_ptr.vmem [resolvable:$true] %s2207
          %2210 = dma.vmem_to_hbm [thread:$0]  %s2208, 128, %s2205, %s2193
        $region84: #{tpu_custom_call.1} parent=79 // pred_fallthru
          _
      $region80: #{tpu_custom_call.1} parent=5 // pred_fallthru
        _
      %p2211 = scmp.le.s32.totalorder 2, %s24
      // Predicated region
      $region85: #{tpu_custom_call.1} parent=5 // pred_check
        %p2212 = pneg %p2211
      $region86: #{tpu_custom_call.1} parent=5 // pred_check_branch
        %2214 = sbr.rel (%p2212) target = $region88
      $region87: #{tpu_custom_call.1} parent=5 // pred_region
        %s2215 = ssub.s32 %s24, 2
        // Predicated region
        $region89: #{tpu_custom_call.1} parent=87 // pred_check
          %p2216 = pneg %p387
        $region90: #{tpu_custom_call.1} parent=87 // pred_check_branch
          %2218 = sbr.rel (%p2216) target = $region92
        $region91: #{tpu_custom_call.1} parent=87 // pred_region
          %s2219 = sand.u32 %s372, 1
          %s2220 = scalar_lea.sflag [#allocation3], %s2219
          %s2221 = sand.u32 %s372, 1
          %s2222 = smul.addr %s2221, 8
          %s2223 = scalar_lea.vmem [#allocation2], %s2222
          %2224 = dma.done %s2220, 128
        $region92: #{tpu_custom_call.1} parent=87 // pred_fallthru
          _
      $region88: #{tpu_custom_call.1} parent=5 // pred_fallthru
        _
    $region6: #{tpu_custom_call.1} parent=1 // loop_footer
      %s28 = sadd.s32 1, %s24
    $region7: #{tpu_custom_call.1} parent=1 // loop_footer_branch
      %23 = sbr.rel target = $region3
    $region8: #{tpu_custom_call.1} parent=1 // loop_exit
      _
    %2225 = vsyncpa [#allocation3], 1
    %s2226 = scalar_lea.sflag [#allocation3], 1
    %2227 = vsyncpa %s2226, 1

</llo_original>
